<compile_context>
chip_gen: v7x
topology: tpu7x:2x2x1
jax: 0.10.0
libtpu: 0.0.40
codegen_flags: <defaults>
</compile_context>

<pallas_src>
import functools

import jax
import jax.numpy as jnp
from jax.experimental import pallas as pl
from jax.experimental.pallas import tpu as pltpu

_LANE = 128
_SUBLANE_PACK = 16          # bf16 packs 16 rows per vreg sublane group
_EPS = 1e-12                # torch.nn.functional.normalize default eps


def _round_up(n, m):
    return ((n + m - 1) // m) * m


def _pad2d(x, rows, cols):
    r, c = x.shape
    if r == rows and c == cols:
        return x
    return jnp.pad(x, ((0, rows - r), (0, cols - c)))


@functools.lru_cache(maxsize=1)
def _device_defaults():
    """(batch_tile_target, vmem_limit_bytes, is_v7x) for the local TPU."""
    try:
        kind = jax.devices()[0].device_kind.lower()
    except Exception:
        kind = ""
    if "v5 lite" in kind or "v5e" in kind or "v5litepod" in kind:
        # 128x128 MXU, 128 MiB physical VMEM, no bf16 VPU.
        return 512, 96 * 1024 * 1024, False
    if "v7" in kind:
        # 2 TensorCores, only 64 MiB VMEM per TC -> smaller scoped budget.
        return 1024, 48 * 1024 * 1024, True
    # v6e / default: 256x256 MXU, 128 MiB physical VMEM.
    return 1024, 96 * 1024 * 1024, False


def _vmem_estimate(tb, ds_pad, dp_pad, c_pad, h1, h2, project):
    """Rough per-grid-step VMEM footprint (bytes) for tile-size capping."""
    f32, bf16 = 4, 2
    # Double-buffered pipelined blocks: f32 activations in, f32 logits out.
    total = 2 * tb * (ds_pad + dp_pad + c_pad) * f32
    # Weights/biases (constant index_map -> resident); count both buffers.
    wbytes = ds_pad * h1 * bf16 + h1 * h2 * bf16 + h2 * c_pad * bf16
    bbytes = (h1 + h2 + c_pad) * f32
    if project:
        wbytes += dp_pad * ds_pad * bf16
        bbytes += ds_pad * f32
    total += 2 * (wbytes + bbytes)
    # In-kernel intermediates (f32 values + bf16 matmul-operand casts).
    total += tb * ds_pad * (f32 + bf16)            # xh (+ bf16 cast for GEMM1)
    if project:
        total += tb * dp_pad * bf16                # bf16 cast of x_proj
        total += tb * ds_pad * f32                 # projected + normalized xp
    total += tb * h1 * (f32 + bf16)                # h1 (+ bf16 cast)
    total += tb * h2 * (f32 + bf16)                # h2 (+ bf16 cast)
    total += tb * c_pad * f32                      # pre-store logits
    return total


def _l2_normalize(v):
    # F.normalize(p=2, dim=1): v / max(||v||_2, eps).  Implemented as
    # v * rsqrt(max(sum(v^2), eps^2)) so the divide goes to the EUP slot.
    # Padded lanes are exactly zero, so the norm over the padded width equals
    # the norm over the real width.
    sumsq = jnp.sum(v * v, axis=-1, keepdims=True)
    return v * jax.lax.rsqrt(jnp.maximum(sumsq, _EPS * _EPS))


def _make_kernel(project: bool, normalize: bool):
    def kernel(*refs):
        if project:
            (xk_ref, xp_ref, wd_ref, bd_ref,
             w1_ref, b1_ref, w2_ref, b2_ref, w3_ref, b3_ref, o_ref) = refs
            w_dtype = w1_ref.dtype
            # decrease_embed: Linear(larger -> smaller) on the MXU, f32 accum.
            xp = jnp.dot(xp_ref[...].astype(w_dtype), wd_ref[...],
                         preferred_element_type=jnp.float32) + bd_ref[...]
            xp = _l2_normalize(xp)
            xh = xk_ref[...] * xp                       # f32 Hadamard
        else:
            (xk_ref, xp_ref,
             w1_ref, b1_ref, w2_ref, b2_ref, w3_ref, b3_ref, o_ref) = refs
            w_dtype = w1_ref.dtype
            xh = xk_ref[...] * xp_ref[...]              # f32 Hadamard
        if normalize:
            xh = _l2_normalize(xh)

        # fusion_fc (Dropout = identity in eval mode).
        # TODO(synk): training-mode dropout not implemented.
        h1 = jnp.dot(xh.astype(w_dtype), w1_ref[...],
                     preferred_element_type=jnp.float32)
        h1 = jnp.maximum(h1 + b1_ref[...], 0.0)         # bias + ReLU in f32 (VPU)
        h2 = jnp.dot(h1.astype(w_dtype), w2_ref[...],
                     preferred_element_type=jnp.float32)
        h2 = jnp.maximum(h2 + b2_ref[...], 0.0)
        out = jnp.dot(h2.astype(w_dtype), w3_ref[...],
                      preferred_element_type=jnp.float32)
        o_ref[...] = (out + b3_ref[...]).astype(o_ref.dtype)

    return kernel


def prepare_params(params, *, compute_dtype=jnp.bfloat16):
    """One-time pad + bf16-cast of the weights (hoisted out of the forward)."""
    project = "decrease_w" in params
    ds, h1 = params["w1"].shape
    h2 = params["w2"].shape[1]
    num_classes = params["w3"].shape[1]
    ds_pad = _round_up(ds, _LANE)
    c_pad = _round_up(num_classes, _LANE)

    prepared = {
        "w1": _pad2d(params["w1"], ds_pad, h1).astype(compute_dtype),
        "b1": params["b1"].astype(jnp.float32),
        "w2": params["w2"].astype(compute_dtype),
        "b2": params["b2"].astype(jnp.float32),
        "w3": _pad2d(params["w3"], h2, c_pad).astype(compute_dtype),
        "b3": _pad2d(params["b3"], 1, c_pad).astype(jnp.float32),
    }
    meta = {"project": project, "ds": ds, "ds_pad": ds_pad, "H1": h1, "H2": h2,
            "num_classes": num_classes, "c_pad": c_pad}
    if project:
        dl = params["decrease_w"].shape[0]
        dl_pad = _round_up(dl, _LANE)
        meta["dl"] = dl
        meta["dl_pad"] = dl_pad
        prepared["wd"] = _pad2d(params["decrease_w"], dl_pad, ds_pad).astype(compute_dtype)
        prepared["bd"] = _pad2d(params["decrease_b"], 1, ds_pad).astype(jnp.float32)
    # Commit to device once so every forward call reuses the padded buffers.
    prepared = {k: jax.device_put(v) for k, v in prepared.items()}
    return prepared, meta


def two_embedding_hadamard_forward(x1, x2, prepared, meta, *, normalize=False,
                                   batch_tile=None):
    """Fused TwoEmbeddingHadamardModel forward (eval mode)."""
    B = x1.shape[0]
    assert x2.shape[0] == B
    d1, d2 = x1.shape[1], x2.shape[1]
    project = meta["project"]
    assert project == (d1 != d2), "params do not match the input dims"
    # Mirror the PyTorch branch: the larger-dim input goes through decrease_embed.
    if project and d1 > d2:
        x_proj, x_keep = x1, x2
    else:
        x_proj, x_keep = x2, x1

    ds_pad, c_pad = meta["ds_pad"], meta["c_pad"]
    H1, H2 = meta["H1"], meta["H2"]
    num_classes = meta["num_classes"]
    dp_pad = meta["dl_pad"] if project else ds_pad

    # ---- batch-tile selection --------------------------------------------
    tb_target, vmem_limit, is_v7x = _device_defaults()
    if batch_tile is not None:
        tb_target = batch_tile
    tb = _round_up(min(tb_target, _round_up(B, _SUBLANE_PACK)), _SUBLANE_PACK)
    # v7x has two TensorCores: make sure medium batches produce >=2 grid steps.
    if is_v7x and _round_up(B, tb) // tb < 2 and B > 2 * _SUBLANE_PACK:
        tb = min(tb, _round_up(pl.cdiv(B, 2), _SUBLANE_PACK))
    # Cap the tile so pipelined buffers + f32 intermediates fit the VMEM budget.
    budget = int(0.85 * vmem_limit)
    while tb > _SUBLANE_PACK and _vmem_estimate(
            tb, ds_pad, dp_pad, c_pad, H1, H2, project) > budget:
        tb = max(_SUBLANE_PACK, _round_up(tb // 2, _SUBLANE_PACK))
    b_pad = _round_up(B, tb)
    grid = (b_pad // tb,)

    # ---- activations: pad only (f32 kept; bf16 cast happens in-kernel) ----
    xk = _pad2d(x_keep, b_pad, ds_pad).astype(jnp.float32)
    xp = _pad2d(x_proj, b_pad, dp_pad).astype(jnp.float32)

    # ---- operands / specs --------------------------------------------------
    if project:
        weights = (prepared["wd"], prepared["w1"], prepared["w2"], prepared["w3"])
        biases = (prepared["bd"], prepared["b1"], prepared["b2"], prepared["b3"])
    else:
        weights = (prepared["w1"], prepared["w2"], prepared["w3"])
        biases = (prepared["b1"], prepared["b2"], prepared["b3"])

    in_specs = [
        pl.BlockSpec((tb, ds_pad), lambda i: (i, 0)),
        pl.BlockSpec((tb, dp_pad), lambda i: (i, 0)),
    ]
    operands = [xk, xp]
    for w, b in zip(weights, biases):
        # Constant index_map -> the block stays resident across the whole grid.
        in_specs += [pl.BlockSpec(w.shape, lambda i: (0, 0)),
                     pl.BlockSpec(b.shape, lambda i: (0, 0))]
        operands += [w, b]

    flops = 2 * b_pad * (ds_pad * H1 + H1 * H2 + H2 * c_pad)
    if project:
        flops += 2 * b_pad * dp_pad * ds_pad
    n_norms = (1 if project else 0) + (1 if normalize else 0)
    bytes_accessed = (xk.size * 4 + xp.size * 4 + b_pad * c_pad * 4
                      + sum(w.size * w.dtype.itemsize for w in weights)
                      + sum(b.size * b.dtype.itemsize for b in biases))
    cost = pl.CostEstimate(flops=int(flops),
                           transcendentals=int(n_norms * b_pad),
                           bytes_accessed=int(bytes_accessed))

    out = pl.pallas_call(
        _make_kernel(project, normalize),
        out_shape=jax.ShapeDtypeStruct((b_pad, c_pad), jnp.float32),
        grid_spec=pltpu.PrefetchScalarGridSpec(
            num_scalar_prefetch=0,
            grid=grid,
            in_specs=in_specs,
            out_specs=pl.BlockSpec((tb, c_pad), lambda i: (i, 0)),
        ),
        compiler_params=pltpu.CompilerParams(
            dimension_semantics=("parallel",),
            vmem_limit_bytes=int(vmem_limit),
        ),
        cost_estimate=cost,
    )(*operands)

    return out[:B, :num_classes]


def init_params(key, embed_dim1, embed_dim2, num_classes, dtype=jnp.float32):
    """nn.Linear-style params (stored (in, out)), uniform(+-1/sqrt(fan_in))."""
    ds, dl = min(embed_dim1, embed_dim2), max(embed_dim1, embed_dim2)

    def linear(k, fan_in, fan_out):
        kw, kb = jax.random.split(k)
        bound = 1.0 / (fan_in ** 0.5)
        w = jax.random.uniform(kw, (fan_in, fan_out), dtype, -bound, bound)
        b = jax.random.uniform(kb, (1, fan_out), dtype, -bound, bound)
        return w, b

    keys = jax.random.split(key, 4)
    params = {}
    if embed_dim1 != embed_dim2:
        params["decrease_w"], params["decrease_b"] = linear(keys[0], dl, ds)
    params["w1"], params["b1"] = linear(keys[1], ds, 1024)
    params["w2"], params["b2"] = linear(keys[2], 1024, 256)
    params["w3"], params["b3"] = linear(keys[3], 256, num_classes)
    return params


def _reference_forward(x1, x2, params, *, normalize=False):
    """Pure-JAX f32 reference matching the PyTorch module (eval mode)."""
    def l2n(v):
        n = jnp.sqrt(jnp.sum(v * v, axis=1, keepdims=True))
        return v / jnp.maximum(n, _EPS)

    if "decrease_w" in params:
        if x1.shape[1] > x2.shape[1]:
            x1 = l2n(x1 @ params["decrease_w"] + params["decrease_b"])
        else:
            x2 = l2n(x2 @ params["decrease_w"] + params["decrease_b"])
    xh = x1 * x2
    if normalize:
        xh = l2n(xh)
    h1 = jnp.maximum(xh @ params["w1"] + params["b1"], 0.0)
    h2 = jnp.maximum(h1 @ params["w2"] + params["b2"], 0.0)
    return h2 @ params["w3"] + params["b3"]


if __name__ == "__main__":
    key = jax.random.PRNGKey(0)
    batch = 16
    embed_dim1, embed_dim2 = 48, 32      # different dims -> exercises decrease_embed
    num_classes = 10
    normalize = True

    k_params, k1, k2 = jax.random.split(key, 3)
    params = init_params(k_params, embed_dim1, embed_dim2, num_classes)
    x1 = jax.random.normal(k1, (batch, embed_dim1), jnp.float32)
    x2 = jax.random.normal(k2, (batch, embed_dim2), jnp.float32)

    prepared, meta = prepare_params(params)   # one-time weight pad + bf16 cast
    out = two_embedding_hadamard_forward(x1, x2, prepared, meta,
                                         normalize=normalize)
    out = jax.block_until_ready(out)
    assert out.shape == (batch, num_classes)

    ref = _reference_forward(x1, x2, params, normalize=normalize)
    # bf16 matmul operands (f32 accumulation, f32 Hadamard/normalize) vs
    # pure-f32 reference -> modest tolerance.
    err = float(jnp.max(jnp.abs(out - ref)))
    assert jnp.allclose(out, ref, atol=2e-2, rtol=2e-2), f"max abs err {err}"

    print("KERNEL_OK")
</pallas_src>

<mosaic_0001>
module attributes {stable_mosaic.version = 11 : i64} {
  func.func @kernel(%arg0: i32, %arg1: memref<16x128xf32, #tpu.memory_space<vmem>>, %arg2: memref<16x128xf32, #tpu.memory_space<vmem>>, %arg3: memref<128x128xbf16, #tpu.memory_space<vmem>>, %arg4: memref<1x128xf32, #tpu.memory_space<vmem>>, %arg5: memref<128x1024xbf16, #tpu.memory_space<vmem>>, %arg6: memref<1x1024xf32, #tpu.memory_space<vmem>>, %arg7: memref<1024x256xbf16, #tpu.memory_space<vmem>>, %arg8: memref<1x256xf32, #tpu.memory_space<vmem>>, %arg9: memref<256x128xbf16, #tpu.memory_space<vmem>>, %arg10: memref<1x128xf32, #tpu.memory_space<vmem>>, %arg11: memref<16x128xf32, #tpu.memory_space<vmem>>) attributes {dimension_semantics = [#tpu.dimension_semantics<parallel>], iteration_bounds = array<i64: 1>, scalar_prefetch = 0 : i64, scratch_operands = 0 : i64, tpu.core_type = #tpu.core_type<tc>, window_params = [{transform_indices = @transform_0, window_bounds = array<i64: 16, 128>}, {transform_indices = @transform_1, window_bounds = array<i64: 16, 128>}, {pipeline_mode = #tpu.pipeline_mode<synchronous>, transform_indices = @transform_2, window_bounds = array<i64: 128, 128>}, {pipeline_mode = #tpu.pipeline_mode<synchronous>, transform_indices = @transform_3, window_bounds = array<i64: 1, 128>}, {pipeline_mode = #tpu.pipeline_mode<synchronous>, transform_indices = @transform_4, window_bounds = array<i64: 128, 1024>}, {pipeline_mode = #tpu.pipeline_mode<synchronous>, transform_indices = @transform_5, window_bounds = array<i64: 1, 1024>}, {pipeline_mode = #tpu.pipeline_mode<synchronous>, transform_indices = @transform_6, window_bounds = array<i64: 1024, 256>}, {pipeline_mode = #tpu.pipeline_mode<synchronous>, transform_indices = @transform_7, window_bounds = array<i64: 1, 256>}, {pipeline_mode = #tpu.pipeline_mode<synchronous>, transform_indices = @transform_8, window_bounds = array<i64: 256, 128>}, {pipeline_mode = #tpu.pipeline_mode<synchronous>, transform_indices = @transform_9, window_bounds = array<i64: 1, 128>}, {transform_indices = @transform_10, window_bounds = array<i64: 16, 128>}]} {
    %c0 = arith.constant 0 : index
    %c0_0 = arith.constant 0 : index
    %0 = vector.load %arg2[%c0, %c0_0] : memref<16x128xf32, #tpu.memory_space<vmem>>, vector<16x128xf32>
    %1 = arith.truncf %0 : vector<16x128xf32> to vector<16x128xbf16>
    %c0_1 = arith.constant 0 : index
    %c0_2 = arith.constant 0 : index
    %2 = vector.load %arg3[%c0_1, %c0_2] : memref<128x128xbf16, #tpu.memory_space<vmem>>, vector<128x128xbf16>
    %cst = arith.constant dense<0.000000e+00> : vector<16x128xf32>
    %3 = tpu.matmul %1, %2, %cst {dimension_numbers = #tpu.dot_dimension_numbers<[1], [0], [0], [1], [0, 0, 1, 1], [], []>} : vector<16x128xbf16>, vector<128x128xbf16>, vector<16x128xf32> -> vector<16x128xf32>
    %c0_3 = arith.constant 0 : index
    %c0_4 = arith.constant 0 : index
    %4 = vector.load %arg4[%c0_3, %c0_4] : memref<1x128xf32, #tpu.memory_space<vmem>>, vector<1x128xf32>
    %5 = vector.broadcast %4 : vector<1x128xf32> to vector<16x128xf32>
    %6 = arith.addf %3, %5 : vector<16x128xf32>
    %7 = arith.mulf %6, %6 : vector<16x128xf32>
    %cst_5 = arith.constant dense<0.000000e+00> : vector<16xf32>
    %8 = vector.multi_reduction <add>, %7, %cst_5 [1] : vector<16x128xf32> to vector<16xf32>
    %9 = vector.shape_cast %8 : vector<16xf32> to vector<16x1xf32>
    %cst_6 = arith.constant 1.000000e-24 : f32
    %10 = vector.broadcast %cst_6 : f32 to vector<16x1xf32>
    %11 = arith.maximumf %9, %10 : vector<16x1xf32>
    %12 = math.rsqrt %11 : vector<16x1xf32>
    %13 = vector.broadcast %12 : vector<16x1xf32> to vector<16x128xf32>
    %14 = arith.mulf %6, %13 : vector<16x128xf32>
    %c0_7 = arith.constant 0 : index
    %c0_8 = arith.constant 0 : index
    %15 = vector.load %arg1[%c0_7, %c0_8] : memref<16x128xf32, #tpu.memory_space<vmem>>, vector<16x128xf32>
    %16 = arith.mulf %15, %14 : vector<16x128xf32>
    %17 = arith.mulf %16, %16 : vector<16x128xf32>
    %cst_9 = arith.constant dense<0.000000e+00> : vector<16xf32>
    %18 = vector.multi_reduction <add>, %17, %cst_9 [1] : vector<16x128xf32> to vector<16xf32>
    %19 = vector.shape_cast %18 : vector<16xf32> to vector<16x1xf32>
    %cst_10 = arith.constant 1.000000e-24 : f32
    %20 = vector.broadcast %cst_10 : f32 to vector<16x1xf32>
    %21 = arith.maximumf %19, %20 : vector<16x1xf32>
    %22 = math.rsqrt %21 : vector<16x1xf32>
    %23 = vector.broadcast %22 : vector<16x1xf32> to vector<16x128xf32>
    %24 = arith.mulf %16, %23 : vector<16x128xf32>
    %25 = arith.truncf %24 : vector<16x128xf32> to vector<16x128xbf16>
    %c0_11 = arith.constant 0 : index
    %c0_12 = arith.constant 0 : index
    %26 = vector.load %arg5[%c0_11, %c0_12] : memref<128x1024xbf16, #tpu.memory_space<vmem>>, vector<128x1024xbf16>
    %cst_13 = arith.constant dense<0.000000e+00> : vector<16x1024xf32>
    %27 = tpu.matmul %25, %26, %cst_13 {dimension_numbers = #tpu.dot_dimension_numbers<[1], [0], [0], [1], [0, 0, 1, 1], [], []>} : vector<16x128xbf16>, vector<128x1024xbf16>, vector<16x1024xf32> -> vector<16x1024xf32>
    %c0_14 = arith.constant 0 : index
    %c0_15 = arith.constant 0 : index
    %28 = vector.load %arg6[%c0_14, %c0_15] : memref<1x1024xf32, #tpu.memory_space<vmem>>, vector<1x1024xf32>
    %29 = vector.broadcast %28 : vector<1x1024xf32> to vector<16x1024xf32>
    %30 = arith.addf %27, %29 : vector<16x1024xf32>
    %cst_16 = arith.constant 0.000000e+00 : f32
    %31 = vector.broadcast %cst_16 : f32 to vector<16x1024xf32>
    %32 = arith.maximumf %30, %31 : vector<16x1024xf32>
    %33 = arith.truncf %32 : vector<16x1024xf32> to vector<16x1024xbf16>
    %c0_17 = arith.constant 0 : index
    %c0_18 = arith.constant 0 : index
    %34 = vector.load %arg7[%c0_17, %c0_18] : memref<1024x256xbf16, #tpu.memory_space<vmem>>, vector<1024x256xbf16>
    %cst_19 = arith.constant dense<0.000000e+00> : vector<16x256xf32>
    %35 = tpu.matmul %33, %34, %cst_19 {dimension_numbers = #tpu.dot_dimension_numbers<[1], [0], [0], [1], [0, 0, 1, 1], [], []>} : vector<16x1024xbf16>, vector<1024x256xbf16>, vector<16x256xf32> -> vector<16x256xf32>
    %c0_20 = arith.constant 0 : index
    %c0_21 = arith.constant 0 : index
    %36 = vector.load %arg8[%c0_20, %c0_21] : memref<1x256xf32, #tpu.memory_space<vmem>>, vector<1x256xf32>
    %37 = vector.broadcast %36 : vector<1x256xf32> to vector<16x256xf32>
    %38 = arith.addf %35, %37 : vector<16x256xf32>
    %cst_22 = arith.constant 0.000000e+00 : f32
    %39 = vector.broadcast %cst_22 : f32 to vector<16x256xf32>
    %40 = arith.maximumf %38, %39 : vector<16x256xf32>
    %41 = arith.truncf %40 : vector<16x256xf32> to vector<16x256xbf16>
    %c0_23 = arith.constant 0 : index
    %c0_24 = arith.constant 0 : index
    %42 = vector.load %arg9[%c0_23, %c0_24] : memref<256x128xbf16, #tpu.memory_space<vmem>>, vector<256x128xbf16>
    %cst_25 = arith.constant dense<0.000000e+00> : vector<16x128xf32>
    %43 = tpu.matmul %41, %42, %cst_25 {dimension_numbers = #tpu.dot_dimension_numbers<[1], [0], [0], [1], [0, 0, 1, 1], [], []>} : vector<16x256xbf16>, vector<256x128xbf16>, vector<16x128xf32> -> vector<16x128xf32>
    %c0_26 = arith.constant 0 : index
    %c0_27 = arith.constant 0 : index
    %44 = vector.load %arg10[%c0_26, %c0_27] : memref<1x128xf32, #tpu.memory_space<vmem>>, vector<1x128xf32>
    %45 = vector.broadcast %44 : vector<1x128xf32> to vector<16x128xf32>
    %46 = arith.addf %43, %45 : vector<16x128xf32>
    %c0_28 = arith.constant 0 : index
    %c0_29 = arith.constant 0 : index
    %47 = vector.load %arg11[%c0_28, %c0_29] : memref<16x128xf32, #tpu.memory_space<vmem>>, vector<16x128xf32>
    tpu.vector_store %arg11[%c0_28, %c0_29], %46 {strides = array<i32>} : memref<16x128xf32, #tpu.memory_space<vmem>>, vector<16x128xf32>,
    return
  }
  func.func @transform_0(%arg0: i32) -> (i32, i32) {
    %c0_i32 = arith.constant 0 : i32
    %c0_i32_0 = arith.constant 0 : i32
    return %arg0, %c0_i32 : i32, i32
  }
  func.func @transform_1(%arg0: i32) -> (i32, i32) {
    %c0_i32 = arith.constant 0 : i32
    %c0_i32_0 = arith.constant 0 : i32
    return %arg0, %c0_i32 : i32, i32
  }
  func.func @transform_2(%arg0: i32) -> (i32, i32) {
    %c0_i32 = arith.constant 0 : i32
    %c0_i32_0 = arith.constant 0 : i32
    %c0_i32_1 = arith.constant 0 : i32
    return %c0_i32, %c0_i32_0 : i32, i32
  }
  func.func @transform_3(%arg0: i32) -> (i32, i32) {
    %c0_i32 = arith.constant 0 : i32
    %c0_i32_0 = arith.constant 0 : i32
    %c0_i32_1 = arith.constant 0 : i32
    return %c0_i32, %c0_i32_0 : i32, i32
  }
  func.func @transform_4(%arg0: i32) -> (i32, i32) {
    %c0_i32 = arith.constant 0 : i32
    %c0_i32_0 = arith.constant 0 : i32
    %c0_i32_1 = arith.constant 0 : i32
    return %c0_i32, %c0_i32_0 : i32, i32
  }
  func.func @transform_5(%arg0: i32) -> (i32, i32) {
    %c0_i32 = arith.constant 0 : i32
    %c0_i32_0 = arith.constant 0 : i32
    %c0_i32_1 = arith.constant 0 : i32
    return %c0_i32, %c0_i32_0 : i32, i32
  }
  func.func @transform_6(%arg0: i32) -> (i32, i32) {
    %c0_i32 = arith.constant 0 : i32
    %c0_i32_0 = arith.constant 0 : i32
    %c0_i32_1 = arith.constant 0 : i32
    return %c0_i32, %c0_i32_0 : i32, i32
  }
  func.func @transform_7(%arg0: i32) -> (i32, i32) {
    %c0_i32 = arith.constant 0 : i32
    %c0_i32_0 = arith.constant 0 : i32
    %c0_i32_1 = arith.constant 0 : i32
    return %c0_i32, %c0_i32_0 : i32, i32
  }
  func.func @transform_8(%arg0: i32) -> (i32, i32) {
    %c0_i32 = arith.constant 0 : i32
    %c0_i32_0 = arith.constant 0 : i32
    %c0_i32_1 = arith.constant 0 : i32
    return %c0_i32, %c0_i32_0 : i32, i32
  }
  func.func @transform_9(%arg0: i32) -> (i32, i32) {
    %c0_i32 = arith.constant 0 : i32
    %c0_i32_0 = arith.constant 0 : i32
    %c0_i32_1 = arith.constant 0 : i32
    return %c0_i32, %c0_i32_0 : i32, i32
  }
  func.func @transform_10(%arg0: i32) -> (i32, i32) {
    %c0_i32 = arith.constant 0 : i32
    %c0_i32_0 = arith.constant 0 : i32
    return %arg0, %c0_i32 : i32, i32
  }
}

</mosaic_0001>

<llo_original>
// kernel: tpu_custom_call.1
$region0: #{tpu_custom_call.1}
  #allocation0 [shape = 'u32[]', space=smem, size = 0x4, offset = 0x4, fixed_abs, tag = 'smem constant byte address 0x4 - core index']
  #allocation1 [shape = 'u32[144,128]{1,0:T(1,128)}', space=vmem, size = 0x12000, scoped, tag = 'internal scratch']
  %s0 = inlined_call_operand.hbm [shape: f32[16,128], index: 0, kind: input, shape index: {}]
  %s1 = inlined_call_operand.hbm [shape: f32[16,128], index: 1, kind: input, shape index: {}]
  %s2 = inlined_call_operand.hbm [shape: bf16[128,128], index: 2, kind: input, shape index: {}]
  %s3 = inlined_call_operand.hbm [shape: f32[1,128], index: 3, kind: input, shape index: {}]
  %s4 = inlined_call_operand.hbm [shape: bf16[128,1024], index: 4, kind: input, shape index: {}]
  %s5 = inlined_call_operand.hbm [shape: f32[1,1024], index: 5, kind: input, shape index: {}]
  %s6 = inlined_call_operand.hbm [shape: bf16[1024,256], index: 6, kind: input, shape index: {}]
  %s7 = inlined_call_operand.hbm [shape: f32[1,256], index: 7, kind: input, shape index: {}]
  %s8 = inlined_call_operand.hbm [shape: bf16[256,128], index: 8, kind: input, shape index: {}]
  %s9 = inlined_call_operand.hbm [shape: f32[1,128], index: 9, kind: input, shape index: {}]
  %s10 = inlined_call_operand.hbm [shape: f32[16,128], index: 10, kind: output, shape index: {}]
  %s11 = sld [smem:[#allocation0]]
  $region90: #{tpu_custom_call.1} parent=0
    _
  %s13 = ssub.s32 1, %s11
  %s14 = scalar_select 0, %s13, %s11
  $region1: #{tpu_custom_call.1} parent=0
    #allocation2 [shape = 'u8[8192]{0}', space=vmem, size = 0x2000, scoped, tag = 'input window, operand 0, single buffered']
    #allocation3 [shape = 's32[1]{0}', space=sflag, size = 0x4, scoped, tag = 'scoped memory for tpu_custom_call.1']
    #allocation4 [shape = 's32[1]{0}', space=sflag, size = 0x4, scoped, tag = 'scoped memory for tpu_custom_call.1']
    #allocation5 [shape = 'u8[8192]{0}', space=vmem, size = 0x2000, scoped, tag = 'input window, operand 1, single buffered']
    #allocation6 [shape = 's32[1]{0}', space=sflag, size = 0x4, scoped, tag = 'scoped memory for tpu_custom_call.1']
    #allocation7 [shape = 'u8[32768]{0}', space=vmem, size = 0x8000, scoped, tag = 'input window, operand 2, single buffered']
    #allocation8 [shape = 'u8[512]{0}', space=vmem, size = 0x400, scoped, tag = 'input window, operand 3, single buffered']
    #allocation9 [shape = 's32[1]{0}', space=sflag, size = 0x4, scoped, tag = 'scoped memory for tpu_custom_call.1']
    #allocation10 [shape = 'u8[262144]{0}', space=vmem, size = 0x40000, scoped, tag = 'input window, operand 4, single buffered']
    #allocation11 [shape = 'u8[4096]{0}', space=vmem, size = 0x1000, scoped, tag = 'input window, operand 5, single buffered']
    #allocation12 [shape = 's32[1]{0}', space=sflag, size = 0x4, scoped, tag = 'scoped memory for tpu_custom_call.1']
    #allocation13 [shape = 'u8[524288]{0}', space=vmem, size = 0x80000, scoped, tag = 'input window, operand 6, single buffered']
    #allocation14 [shape = 'u8[1024]{0}', space=vmem, size = 0x400, scoped, tag = 'input window, operand 7, single buffered']
    #allocation15 [shape = 's32[1]{0}', space=sflag, size = 0x4, scoped, tag = 'scoped memory for tpu_custom_call.1']
    #allocation16 [shape = 'u8[65536]{0}', space=vmem, size = 0x10000, scoped, tag = 'input window, operand 8, single buffered']
    #allocation17 [shape = 'u8[512]{0}', space=vmem, size = 0x400, scoped, tag = 'input window, operand 9, single buffered']
    #allocation18 [shape = 's32[1]{0}', space=sflag, size = 0x4, scoped, tag = 'scoped memory for tpu_custom_call.1']
    #allocation19 [shape = 'u8[8192]{0}', space=vmem, size = 0x2000, scoped, tag = 'output window, operand 0, single buffered']
    %15 = vsyncpa [#allocation3], 0
    %16 = vsyncpa [#allocation6], 0
    %17 = vsyncpa [#allocation9], 0
    %18 = vsyncpa [#allocation12], 0
    %19 = vsyncpa [#allocation15], 0
    %20 = vsyncpa [#allocation18], 0
    %21 = vsyncpa [#allocation4], 0
    // Predicated region
    $region2: #{tpu_custom_call.1} parent=1 // pred_check
      _
    $region3: #{tpu_custom_call.1} parent=1 // pred_check_branch
      %23 = sbr.rel (0) target = $region5
    $region4: #{tpu_custom_call.1} parent=1 // pred_region
      %s25 = ssub.s32 256, 256
      %26 = vsyncadd [#allocation3], %s25
      %s27 = sshll.u32 [#allocation2], 4
      %s28 = int_to_ptr.vmem [resolvable:$true] %s27
      %33 = dma.hbm_to_vmem [thread:$0]  %s0, 256, %s28, [#allocation3], 128, 128, 8
    $region5: #{tpu_custom_call.1} parent=1 // pred_fallthru
      _
    // Predicated region
    $region6: #{tpu_custom_call.1} parent=1 // pred_check
      _
    $region7: #{tpu_custom_call.1} parent=1 // pred_check_branch
      %35 = sbr.rel (0) target = $region9
    $region8: #{tpu_custom_call.1} parent=1 // pred_region
      %s37 = ssub.s32 256, 256
      %38 = vsyncadd [#allocation6], %s37
      %s39 = sshll.u32 [#allocation5], 4
      %s40 = int_to_ptr.vmem [resolvable:$true] %s39
      %45 = dma.hbm_to_vmem [thread:$0]  %s1, 256, %s40, [#allocation6], 128, 128, 8
    $region9: #{tpu_custom_call.1} parent=1 // pred_fallthru
      _
    // Predicated region
    $region10: #{tpu_custom_call.1} parent=1 // pred_check
      _
    $region11: #{tpu_custom_call.1} parent=1 // pred_check_branch
      %47 = sbr.rel (0) target = $region13
    $region12: #{tpu_custom_call.1} parent=1 // pred_region
      %s49 = ssub.s32 1024, 1024
      %50 = vsyncadd [#allocation6], %s49
      %s51 = sshll.u32 [#allocation7], 4
      %s52 = int_to_ptr.vmem [resolvable:$true] %s51
      %57 = dma.hbm_to_vmem [thread:$0]  %s2, 1024, %s52, [#allocation6], 64, 64, 4
    $region13: #{tpu_custom_call.1} parent=1 // pred_fallthru
      _
    // Predicated region
    $region14: #{tpu_custom_call.1} parent=1 // pred_check
      _
    $region15: #{tpu_custom_call.1} parent=1 // pred_check_branch
      %59 = sbr.rel (0) target = $region17
    $region16: #{tpu_custom_call.1} parent=1 // pred_region
      %s61 = ssub.s32 16, 16
      %62 = vsyncadd [#allocation9], %s61
      %s64 = sshll.u32 [#allocation8], 4
      %s65 = int_to_ptr.vmem [resolvable:$true] %s64
      %67 = dma.hbm_to_vmem [thread:$0]  %s3, 16, %s65, [#allocation9]
    $region17: #{tpu_custom_call.1} parent=1 // pred_fallthru
      _
    // Predicated region
    $region18: #{tpu_custom_call.1} parent=1 // pred_check
      _
    $region19: #{tpu_custom_call.1} parent=1 // pred_check_branch
      %69 = sbr.rel (0) target = $region21
    $region20: #{tpu_custom_call.1} parent=1 // pred_region
      %s71 = ssub.s32 8192, 8192
      %72 = vsyncadd [#allocation9], %s71
      %s73 = sshll.u32 [#allocation10], 4
      %s74 = int_to_ptr.vmem [resolvable:$true] %s73
      %79 = dma.hbm_to_vmem [thread:$0]  %s4, 8192, %s74, [#allocation9], 512, 512, 32
    $region21: #{tpu_custom_call.1} parent=1 // pred_fallthru
      _
    // Predicated region
    $region22: #{tpu_custom_call.1} parent=1 // pred_check
      _
    $region23: #{tpu_custom_call.1} parent=1 // pred_check_branch
      %81 = sbr.rel (0) target = $region25
    $region24: #{tpu_custom_call.1} parent=1 // pred_region
      %s83 = ssub.s32 128, 128
      %84 = vsyncadd [#allocation12], %s83
      %s86 = sshll.u32 [#allocation11], 4
      %s87 = int_to_ptr.vmem [resolvable:$true] %s86
      %89 = dma.hbm_to_vmem [thread:$0]  %s5, 128, %s87, [#allocation12]
    $region25: #{tpu_custom_call.1} parent=1 // pred_fallthru
      _
    // Predicated region
    $region26: #{tpu_custom_call.1} parent=1 // pred_check
      _
    $region27: #{tpu_custom_call.1} parent=1 // pred_check_branch
      %91 = sbr.rel (0) target = $region29
    $region28: #{tpu_custom_call.1} parent=1 // pred_region
      %s93 = ssub.s32 16384, 16384
      %94 = vsyncadd [#allocation12], %s93
      %s95 = sshll.u32 [#allocation13], 4
      %s96 = int_to_ptr.vmem [resolvable:$true] %s95
      %101 = dma.hbm_to_vmem [thread:$0]  %s6, 16384, %s96, [#allocation12], 128, 128, 8
    $region29: #{tpu_custom_call.1} parent=1 // pred_fallthru
      _
    // Predicated region
    $region30: #{tpu_custom_call.1} parent=1 // pred_check
      _
    $region31: #{tpu_custom_call.1} parent=1 // pred_check_branch
      %103 = sbr.rel (0) target = $region33
    $region32: #{tpu_custom_call.1} parent=1 // pred_region
      %s105 = ssub.s32 32, 32
      %106 = vsyncadd [#allocation15], %s105
      %s108 = sshll.u32 [#allocation14], 4
      %s109 = int_to_ptr.vmem [resolvable:$true] %s108
      %111 = dma.hbm_to_vmem [thread:$0]  %s7, 32, %s109, [#allocation15]
    $region33: #{tpu_custom_call.1} parent=1 // pred_fallthru
      _
    // Predicated region
    $region34: #{tpu_custom_call.1} parent=1 // pred_check
      _
    $region35: #{tpu_custom_call.1} parent=1 // pred_check_branch
      %113 = sbr.rel (0) target = $region37
    $region36: #{tpu_custom_call.1} parent=1 // pred_region
      %s115 = ssub.s32 2048, 2048
      %116 = vsyncadd [#allocation15], %s115
      %s117 = sshll.u32 [#allocation16], 4
      %s118 = int_to_ptr.vmem [resolvable:$true] %s117
      %123 = dma.hbm_to_vmem [thread:$0]  %s8, 2048, %s118, [#allocation15], 64, 64, 4
    $region37: #{tpu_custom_call.1} parent=1 // pred_fallthru
      _
    // Predicated region
    $region38: #{tpu_custom_call.1} parent=1 // pred_check
      _
    $region39: #{tpu_custom_call.1} parent=1 // pred_check_branch
      %125 = sbr.rel (0) target = $region41
    $region40: #{tpu_custom_call.1} parent=1 // pred_region
      %s127 = ssub.s32 16, 16
      %128 = vsyncadd [#allocation18], %s127
      %s130 = sshll.u32 [#allocation17], 4
      %s131 = int_to_ptr.vmem [resolvable:$true] %s130
      %133 = dma.hbm_to_vmem [thread:$0]  %s9, 16, %s131, [#allocation18]
    $region41: #{tpu_custom_call.1} parent=1 // pred_fallthru
      _
    // Predicated region
    $region42: #{tpu_custom_call.1} parent=1 // pred_check
      _
    $region43: #{tpu_custom_call.1} parent=1 // pred_check_branch
      %135 = sbr.rel (0) target = $region45
    $region44: #{tpu_custom_call.1} parent=1 // pred_region
      %136 = dma.done [#allocation3], 256
    $region45: #{tpu_custom_call.1} parent=1 // pred_fallthru
      _
    // Predicated region
    $region46: #{tpu_custom_call.1} parent=1 // pred_check
      _
    $region47: #{tpu_custom_call.1} parent=1 // pred_check_branch
      %138 = sbr.rel (0) target = $region49
    $region48: #{tpu_custom_call.1} parent=1 // pred_region
      %139 = dma.done [#allocation6], 256
    $region49: #{tpu_custom_call.1} parent=1 // pred_fallthru
      _
    // Predicated region
    $region50: #{tpu_custom_call.1} parent=1 // pred_check
      _
    $region51: #{tpu_custom_call.1} parent=1 // pred_check_branch
      %141 = sbr.rel (0) target = $region53
    $region52: #{tpu_custom_call.1} parent=1 // pred_region
      %142 = dma.done [#allocation6], 1024
    $region53: #{tpu_custom_call.1} parent=1 // pred_fallthru
      _
    // Predicated region
    $region54: #{tpu_custom_call.1} parent=1 // pred_check
      _
    $region55: #{tpu_custom_call.1} parent=1 // pred_check_branch
      %144 = sbr.rel (0) target = $region57
    $region56: #{tpu_custom_call.1} parent=1 // pred_region
      %145 = dma.done [#allocation9], 16
    $region57: #{tpu_custom_call.1} parent=1 // pred_fallthru
      _
    // Predicated region
    $region58: #{tpu_custom_call.1} parent=1 // pred_check
      _
    $region59: #{tpu_custom_call.1} parent=1 // pred_check_branch
      %147 = sbr.rel (0) target = $region61
    $region60: #{tpu_custom_call.1} parent=1 // pred_region
      %148 = dma.done [#allocation9], 8192
    $region61: #{tpu_custom_call.1} parent=1 // pred_fallthru
      _
    // Predicated region
    $region62: #{tpu_custom_call.1} parent=1 // pred_check
      _
    $region63: #{tpu_custom_call.1} parent=1 // pred_check_branch
      %150 = sbr.rel (0) target = $region65
    $region64: #{tpu_custom_call.1} parent=1 // pred_region
      %151 = dma.done [#allocation12], 128
    $region65: #{tpu_custom_call.1} parent=1 // pred_fallthru
      _
    // Predicated region
    $region66: #{tpu_custom_call.1} parent=1 // pred_check
      _
    $region67: #{tpu_custom_call.1} parent=1 // pred_check_branch
      %153 = sbr.rel (0) target = $region69
    $region68: #{tpu_custom_call.1} parent=1 // pred_region
      %154 = dma.done [#allocation12], 16384
    $region69: #{tpu_custom_call.1} parent=1 // pred_fallthru
      _
    // Predicated region
    $region70: #{tpu_custom_call.1} parent=1 // pred_check
      _
    $region71: #{tpu_custom_call.1} parent=1 // pred_check_branch
      %156 = sbr.rel (0) target = $region73
    $region72: #{tpu_custom_call.1} parent=1 // pred_region
      %157 = dma.done [#allocation15], 32
    $region73: #{tpu_custom_call.1} parent=1 // pred_fallthru
      _
    // Predicated region
    $region74: #{tpu_custom_call.1} parent=1 // pred_check
      _
    $region75: #{tpu_custom_call.1} parent=1 // pred_check_branch
      %159 = sbr.rel (0) target = $region77
    $region76: #{tpu_custom_call.1} parent=1 // pred_region
      %160 = dma.done [#allocation15], 2048
    $region77: #{tpu_custom_call.1} parent=1 // pred_fallthru
      _
    // Predicated region
    $region78: #{tpu_custom_call.1} parent=1 // pred_check
      _
    $region79: #{tpu_custom_call.1} parent=1 // pred_check_branch
      %162 = sbr.rel (0) target = $region81
    $region80: #{tpu_custom_call.1} parent=1 // pred_region
      %163 = dma.done [#allocation18], 16
    $region81: #{tpu_custom_call.1} parent=1 // pred_fallthru
      _
    %v165 = vld [vmem:[#allocation5] sm:$0xff]
    %v166 = vld [vmem:[#allocation5 + $0x8] sm:$0xff]
    %v167 = vpack.c.bf16 %v166, %v165
    %v168 = vld [vmem:[#allocation7] sm:$0xf]
    %v169 = vld [vmem:[#allocation7 + $0x4] sm:$0xf]
    %v170 = vld [vmem:[#allocation7 + $0x8] sm:$0xf]
    %v171 = vld [vmem:[#allocation7 + $0xc] sm:$0xf]
    %v172 = vld [vmem:[#allocation7 + $0x10] sm:$0xf]
    %v173 = vld [vmem:[#allocation7 + $0x14] sm:$0xf]
    %v174 = vld [vmem:[#allocation7 + $0x18] sm:$0xf]
    %v175 = vld [vmem:[#allocation7 + $0x1c] sm:$0xf]
    %v176 = vld [vmem:[#allocation7 + $0x20] sm:$0xf]
    %v177 = vld [vmem:[#allocation7 + $0x24] sm:$0xf]
    %v178 = vld [vmem:[#allocation7 + $0x28] sm:$0xf]
    %v179 = vld [vmem:[#allocation7 + $0x2c] sm:$0xf]
    %v180 = vld [vmem:[#allocation7 + $0x30] sm:$0xf]
    %v181 = vld [vmem:[#allocation7 + $0x34] sm:$0xf]
    %v182 = vld [vmem:[#allocation7 + $0x38] sm:$0xf]
    %v183 = vld [vmem:[#allocation7 + $0x3c] sm:$0xf]
    %v184 = vld [vmem:[#allocation8] sm:$0x1]
    %v186 = vlaneseq
    %v187 = vshrl.u32 %v186, 7
    %v188 = vsub.s32 0, %v187
    %v189 = vrot.slane %v184, %v188
    %v207 = vunpack.c.l.b16 %v168
    %v208 = vunpack.c.l.b16 %v169
    %v209 = vunpack.c.l.b16 %v170
    %v210 = vunpack.c.l.b16 %v171
    %v211 = vunpack.c.l.b16 %v172
    %v212 = vunpack.c.l.b16 %v173
    %v213 = vunpack.c.l.b16 %v174
    %v214 = vunpack.c.l.b16 %v175
    %v215 = vunpack.c.l.b16 %v176
    %v216 = vunpack.c.l.b16 %v177
    %v217 = vunpack.c.l.b16 %v178
    %v218 = vunpack.c.l.b16 %v179
    %v219 = vunpack.c.l.b16 %v180
    %v220 = vunpack.c.l.b16 %v181
    %v221 = vunpack.c.l.b16 %v182
    %v222 = vunpack.c.l.b16 %v183
    %v223 = vpack.c.b16 %v208, %v207
    %v224 = vpack.c.b16 %v210, %v209
    %v225 = vpack.c.b16 %v212, %v211
    %v226 = vpack.c.b16 %v214, %v213
    %v227 = vpack.c.b16 %v216, %v215
    %v228 = vpack.c.b16 %v218, %v217
    %v229 = vpack.c.b16 %v220, %v219
    %v230 = vpack.c.b16 %v222, %v221
    %239 = vmatprep.subr.bf16.mxu0 0
    %240 = vmatpush1.bf16.msra.mxu0 %v223
    %241 = vmatprep.subr.bf16.mxu0 0
    %242 = vmatpush1.bf16.msra.mxu0 %v224
    %243 = vmatprep.subr.bf16.mxu0 0
    %244 = vmatpush1.bf16.msra.mxu0 %v225
    %245 = vmatprep.subr.bf16.mxu0 0
    %246 = vmatpush1.bf16.msra.mxu0 %v226
    %247 = vmatprep.subr.bf16.mxu0 0
    %248 = vmatpush1.bf16.msra.mxu0 %v227
    %249 = vmatprep.subr.bf16.mxu0 0
    %250 = vmatpush1.bf16.msra.mxu0 %v228
    %251 = vmatprep.subr.bf16.mxu0 0
    %252 = vmatpush1.bf16.msra.mxu0 %v229
    %253 = vmatprep.subr.bf16.mxu0 0
    %254 = vmatpush1.bf16.msra.mxu0 %v230
    %255 = vmatprep.subr.bf16.mxu0 0
    %256 = vmatpush1.bf16.msra.mxu0 0
    %257 = vmatprep.subr.bf16.mxu0 0
    %258 = vmatpush1.bf16.msra.mxu0 0
    %259 = vmatprep.subr.bf16.mxu0 0
    %260 = vmatpush1.bf16.msra.mxu0 0
    %261 = vmatprep.subr.bf16.mxu0 0
    %262 = vmatpush1.bf16.msra.mxu0 0
    %263 = vmatprep.subr.bf16.mxu0 0
    %264 = vmatpush1.bf16.msra.mxu0 0
    %265 = vmatprep.subr.bf16.mxu0 0
    %266 = vmatpush1.bf16.msra.mxu0 0
    %267 = vmatprep.subr.bf16.mxu0 0
    %268 = vmatpush1.bf16.msra.mxu0 0
    %269 = vmatprep.subr.bf16.mxu0 0
    %270 = vmatpush1.bf16.msra.mxu0 0
    %271 = vmatprep.mubr.bf16.mxu0 0
    %272 = vmatmul.mubr.bf16.gmra.mrb[0].mxu0 %v167
    %v273 = vpop.f32.mrb[0].mxu0
    %v274 = vadd.f32 %v189, %v273
    %v275 = vpop.f32.mrb[0].mxu0
    %v276 = vpop.f32.mrb[0].mxu0
    %v277 = vadd.f32 %v189, %v276
    %v278 = vpop.f32.mrb[0].mxu0
    %279 = vdwg.mxu0
    %v280 = vmul.f32 %v274, %v274
    %v281 = vmul.f32 %v277, %v277
    %282 = vadd.xlane.f32.xlu0 %v280
    %v283 = vpop.xlane.xlu0 %282
    %284 = vadd.xlane.f32.xlu0 %v281
    %v285 = vpop.xlane.xlu0 %284
    %v286 = vmax.f32 %v283, 1e-24
    %v287 = vmax.f32 %v285, 1e-24
    %v288 = vrsqrt.pop %v286
    %v289 = vrsqrt.pop %v287
    %v290 = vmul.f32 %v274, %v288
    %v291 = vmul.f32 %v277, %v289
    %v292 = vld [vmem:[#allocation2] sm:$0xff]
    %v293 = vld [vmem:[#allocation2 + $0x8] sm:$0xff]
    %v294 = vmul.f32 %v292, %v290
    %v295 = vmul.f32 %v293, %v291
    %v296 = vmul.f32 %v294, %v294
    %v297 = vmul.f32 %v295, %v295
    %298 = vadd.xlane.f32.xlu0 %v296
    %v299 = vpop.xlane.xlu0 %298
    %300 = vadd.xlane.f32.xlu0 %v297
    %v301 = vpop.xlane.xlu0 %300
    %v302 = vmax.f32 %v299, 1e-24
    %v303 = vmax.f32 %v301, 1e-24
    %v304 = vrsqrt.pop %v302
    %v305 = vrsqrt.pop %v303
    %v306 = vmul.f32 %v294, %v304
    %v307 = vmul.f32 %v295, %v305
    %v308 = vpack.c.bf16 %v307, %v306
    %v309 = vld [vmem:[#allocation10] sm:$0xff]
    %v310 = vld [vmem:[#allocation10 + $0x8] sm:$0xff]
    %v311 = vld [vmem:[#allocation10 + $0x10] sm:$0xff]
    %v312 = vld [vmem:[#allocation10 + $0x18] sm:$0xff]
    %v313 = vld [vmem:[#allocation10 + $0x20] sm:$0xff]
    %v314 = vld [vmem:[#allocation10 + $0x28] sm:$0xff]
    %v315 = vld [vmem:[#allocation10 + $0x30] sm:$0xff]
    %v316 = vld [vmem:[#allocation10 + $0x38] sm:$0xff]
    %v317 = vld [vmem:[#allocation10 + $0x40] sm:$0xff]
    %v318 = vld [vmem:[#allocation10 + $0x48] sm:$0xff]
    %v319 = vld [vmem:[#allocation10 + $0x50] sm:$0xff]
    %v320 = vld [vmem:[#allocation10 + $0x58] sm:$0xff]
    %v321 = vld [vmem:[#allocation10 + $0x60] sm:$0xff]
    %v322 = vld [vmem:[#allocation10 + $0x68] sm:$0xff]
    %v323 = vld [vmem:[#allocation10 + $0x70] sm:$0xff]
    %v324 = vld [vmem:[#allocation10 + $0x78] sm:$0xff]
    %v325 = vld [vmem:[#allocation10 + $0x80] sm:$0xff]
    %v326 = vld [vmem:[#allocation10 + $0x88] sm:$0xff]
    %v327 = vld [vmem:[#allocation10 + $0x90] sm:$0xff]
    %v328 = vld [vmem:[#allocation10 + $0x98] sm:$0xff]
    %v329 = vld [vmem:[#allocation10 + $0xa0] sm:$0xff]
    %v330 = vld [vmem:[#allocation10 + $0xa8] sm:$0xff]
    %v331 = vld [vmem:[#allocation10 + $0xb0] sm:$0xff]
    %v332 = vld [vmem:[#allocation10 + $0xb8] sm:$0xff]
    %v333 = vld [vmem:[#allocation10 + $0xc0] sm:$0xff]
    %v334 = vld [vmem:[#allocation10 + $0xc8] sm:$0xff]
    %v335 = vld [vmem:[#allocation10 + $0xd0] sm:$0xff]
    %v336 = vld [vmem:[#allocation10 + $0xd8] sm:$0xff]
    %v337 = vld [vmem:[#allocation10 + $0xe0] sm:$0xff]
    %v338 = vld [vmem:[#allocation10 + $0xe8] sm:$0xff]
    %v339 = vld [vmem:[#allocation10 + $0xf0] sm:$0xff]
    %v340 = vld [vmem:[#allocation10 + $0xf8] sm:$0xff]
    %v341 = vld [vmem:[#allocation10 + $0x100] sm:$0xff]
    %v342 = vld [vmem:[#allocation10 + $0x108] sm:$0xff]
    %v343 = vld [vmem:[#allocation10 + $0x110] sm:$0xff]
    %v344 = vld [vmem:[#allocation10 + $0x118] sm:$0xff]
    %v345 = vld [vmem:[#allocation10 + $0x120] sm:$0xff]
    %v346 = vld [vmem:[#allocation10 + $0x128] sm:$0xff]
    %v347 = vld [vmem:[#allocation10 + $0x130] sm:$0xff]
    %v348 = vld [vmem:[#allocation10 + $0x138] sm:$0xff]
    %v349 = vld [vmem:[#allocation10 + $0x140] sm:$0xff]
    %v350 = vld [vmem:[#allocation10 + $0x148] sm:$0xff]
    %v351 = vld [vmem:[#allocation10 + $0x150] sm:$0xff]
    %v352 = vld [vmem:[#allocation10 + $0x158] sm:$0xff]
    %v353 = vld [vmem:[#allocation10 + $0x160] sm:$0xff]
    %v354 = vld [vmem:[#allocation10 + $0x168] sm:$0xff]
    %v355 = vld [vmem:[#allocation10 + $0x170] sm:$0xff]
    %v356 = vld [vmem:[#allocation10 + $0x178] sm:$0xff]
    %v357 = vld [vmem:[#allocation10 + $0x180] sm:$0xff]
    %v358 = vld [vmem:[#allocation10 + $0x188] sm:$0xff]
    %v359 = vld [vmem:[#allocation10 + $0x190] sm:$0xff]
    %v360 = vld [vmem:[#allocation10 + $0x198] sm:$0xff]
    %v361 = vld [vmem:[#allocation10 + $0x1a0] sm:$0xff]
    %v362 = vld [vmem:[#allocation10 + $0x1a8] sm:$0xff]
    %v363 = vld [vmem:[#allocation10 + $0x1b0] sm:$0xff]
    %v364 = vld [vmem:[#allocation10 + $0x1b8] sm:$0xff]
    %v365 = vld [vmem:[#allocation10 + $0x1c0] sm:$0xff]
    %v366 = vld [vmem:[#allocation10 + $0x1c8] sm:$0xff]
    %v367 = vld [vmem:[#allocation10 + $0x1d0] sm:$0xff]
    %v368 = vld [vmem:[#allocation10 + $0x1d8] sm:$0xff]
    %v369 = vld [vmem:[#allocation10 + $0x1e0] sm:$0xff]
    %v370 = vld [vmem:[#allocation10 + $0x1e8] sm:$0xff]
    %v371 = vld [vmem:[#allocation10 + $0x1f0] sm:$0xff]
    %v372 = vld [vmem:[#allocation10 + $0x1f8] sm:$0xff]
    %v373 = vld [vmem:[#allocation11] sm:$0xff]
    %v375 = vlaneseq
    %v376 = vshrl.u32 %v375, 7
    %v377 = vsub.s32 0, %v376
    %v378 = vrot.slane %v373, %v377
    %v379 = vlaneseq
    %v380 = vshrl.u32 %v379, 7
    %v381 = vsub.s32 1, %v380
    %v382 = vrot.slane %v373, %v381
    %v383 = vlaneseq
    %v384 = vshrl.u32 %v383, 7
    %v385 = vsub.s32 2, %v384
    %v386 = vrot.slane %v373, %v385
    %v387 = vlaneseq
    %v388 = vshrl.u32 %v387, 7
    %v389 = vsub.s32 3, %v388
    %v390 = vrot.slane %v373, %v389
    %v391 = vlaneseq
    %v392 = vshrl.u32 %v391, 7
    %v393 = vsub.s32 4, %v392
    %v394 = vrot.slane %v373, %v393
    %v395 = vlaneseq
    %v396 = vshrl.u32 %v395, 7
    %v397 = vsub.s32 5, %v396
    %v398 = vrot.slane %v373, %v397
    %v399 = vlaneseq
    %v400 = vshrl.u32 %v399, 7
    %v401 = vsub.s32 6, %v400
    %v402 = vrot.slane %v373, %v401
    %v403 = vlaneseq
    %v404 = vshrl.u32 %v403, 7
    %v405 = vsub.s32 7, %v404
    %v406 = vrot.slane %v373, %v405
    %v479 = vunpack.c.l.b16 %v309
    %v480 = vunpack.c.h.b16 %v309
    %v481 = vunpack.c.l.b16 %v310
    %v482 = vunpack.c.h.b16 %v310
    %v483 = vunpack.c.l.b16 %v311
    %v484 = vunpack.c.h.b16 %v311
    %v485 = vunpack.c.l.b16 %v312
    %v486 = vunpack.c.h.b16 %v312
    %v487 = vunpack.c.l.b16 %v313
    %v488 = vunpack.c.h.b16 %v313
    %v489 = vunpack.c.l.b16 %v314
    %v490 = vunpack.c.h.b16 %v314
    %v491 = vunpack.c.l.b16 %v315
    %v492 = vunpack.c.h.b16 %v315
    %v493 = vunpack.c.l.b16 %v316
    %v494 = vunpack.c.h.b16 %v316
    %v495 = vunpack.c.l.b16 %v317
    %v496 = vunpack.c.h.b16 %v317
    %v497 = vunpack.c.l.b16 %v318
    %v498 = vunpack.c.h.b16 %v318
    %v499 = vunpack.c.l.b16 %v319
    %v500 = vunpack.c.h.b16 %v319
    %v501 = vunpack.c.l.b16 %v320
    %v502 = vunpack.c.h.b16 %v320
    %v503 = vunpack.c.l.b16 %v321
    %v504 = vunpack.c.h.b16 %v321
    %v505 = vunpack.c.l.b16 %v322
    %v506 = vunpack.c.h.b16 %v322
    %v507 = vunpack.c.l.b16 %v323
    %v508 = vunpack.c.h.b16 %v323
    %v509 = vunpack.c.l.b16 %v324
    %v510 = vunpack.c.h.b16 %v324
    %v511 = vunpack.c.l.b16 %v325
    %v512 = vunpack.c.h.b16 %v325
    %v513 = vunpack.c.l.b16 %v326
    %v514 = vunpack.c.h.b16 %v326
    %v515 = vunpack.c.l.b16 %v327
    %v516 = vunpack.c.h.b16 %v327
    %v517 = vunpack.c.l.b16 %v328
    %v518 = vunpack.c.h.b16 %v328
    %v519 = vunpack.c.l.b16 %v329
    %v520 = vunpack.c.h.b16 %v329
    %v521 = vunpack.c.l.b16 %v330
    %v522 = vunpack.c.h.b16 %v330
    %v523 = vunpack.c.l.b16 %v331
    %v524 = vunpack.c.h.b16 %v331
    %v525 = vunpack.c.l.b16 %v332
    %v526 = vunpack.c.h.b16 %v332
    %v527 = vunpack.c.l.b16 %v333
    %v528 = vunpack.c.h.b16 %v333
    %v529 = vunpack.c.l.b16 %v334
    %v530 = vunpack.c.h.b16 %v334
    %v531 = vunpack.c.l.b16 %v335
    %v532 = vunpack.c.h.b16 %v335
    %v533 = vunpack.c.l.b16 %v336
    %v534 = vunpack.c.h.b16 %v336
    %v535 = vunpack.c.l.b16 %v337
    %v536 = vunpack.c.h.b16 %v337
    %v537 = vunpack.c.l.b16 %v338
    %v538 = vunpack.c.h.b16 %v338
    %v539 = vunpack.c.l.b16 %v339
    %v540 = vunpack.c.h.b16 %v339
    %v541 = vunpack.c.l.b16 %v340
    %v542 = vunpack.c.h.b16 %v340
    %v543 = vunpack.c.l.b16 %v341
    %v544 = vunpack.c.h.b16 %v341
    %v545 = vunpack.c.l.b16 %v342
    %v546 = vunpack.c.h.b16 %v342
    %v547 = vunpack.c.l.b16 %v343
    %v548 = vunpack.c.h.b16 %v343
    %v549 = vunpack.c.l.b16 %v344
    %v550 = vunpack.c.h.b16 %v344
    %v551 = vunpack.c.l.b16 %v345
    %v552 = vunpack.c.h.b16 %v345
    %v553 = vunpack.c.l.b16 %v346
    %v554 = vunpack.c.h.b16 %v346
    %v555 = vunpack.c.l.b16 %v347
    %v556 = vunpack.c.h.b16 %v347
    %v557 = vunpack.c.l.b16 %v348
    %v558 = vunpack.c.h.b16 %v348
    %v559 = vunpack.c.l.b16 %v349
    %v560 = vunpack.c.h.b16 %v349
    %v561 = vunpack.c.l.b16 %v350
    %v562 = vunpack.c.h.b16 %v350
    %v563 = vunpack.c.l.b16 %v351
    %v564 = vunpack.c.h.b16 %v351
    %v565 = vunpack.c.l.b16 %v352
    %v566 = vunpack.c.h.b16 %v352
    %v567 = vunpack.c.l.b16 %v353
    %v568 = vunpack.c.h.b16 %v353
    %v569 = vunpack.c.l.b16 %v354
    %v570 = vunpack.c.h.b16 %v354
    %v571 = vunpack.c.l.b16 %v355
    %v572 = vunpack.c.h.b16 %v355
    %v573 = vunpack.c.l.b16 %v356
    %v574 = vunpack.c.h.b16 %v356
    %v575 = vunpack.c.l.b16 %v357
    %v576 = vunpack.c.h.b16 %v357
    %v577 = vunpack.c.l.b16 %v358
    %v578 = vunpack.c.h.b16 %v358
    %v579 = vunpack.c.l.b16 %v359
    %v580 = vunpack.c.h.b16 %v359
    %v581 = vunpack.c.l.b16 %v360
    %v582 = vunpack.c.h.b16 %v360
    %v583 = vunpack.c.l.b16 %v361
    %v584 = vunpack.c.h.b16 %v361
    %v585 = vunpack.c.l.b16 %v362
    %v586 = vunpack.c.h.b16 %v362
    %v587 = vunpack.c.l.b16 %v363
    %v588 = vunpack.c.h.b16 %v363
    %v589 = vunpack.c.l.b16 %v364
    %v590 = vunpack.c.h.b16 %v364
    %v591 = vunpack.c.l.b16 %v365
    %v592 = vunpack.c.h.b16 %v365
    %v593 = vunpack.c.l.b16 %v366
    %v594 = vunpack.c.h.b16 %v366
    %v595 = vunpack.c.l.b16 %v367
    %v596 = vunpack.c.h.b16 %v367
    %v597 = vunpack.c.l.b16 %v368
    %v598 = vunpack.c.h.b16 %v368
    %v599 = vunpack.c.l.b16 %v369
    %v600 = vunpack.c.h.b16 %v369
    %v601 = vunpack.c.l.b16 %v370
    %v602 = vunpack.c.h.b16 %v370
    %v603 = vunpack.c.l.b16 %v371
    %v604 = vunpack.c.h.b16 %v371
    %v605 = vunpack.c.l.b16 %v372
    %v606 = vunpack.c.h.b16 %v372
    %v607 = vpack.c.b16 %v487, %v479
    %v608 = vpack.c.b16 %v488, %v480
    %v609 = vpack.c.b16 %v489, %v481
    %v610 = vpack.c.b16 %v490, %v482
    %v611 = vpack.c.b16 %v491, %v483
    %v612 = vpack.c.b16 %v492, %v484
    %v613 = vpack.c.b16 %v493, %v485
    %v614 = vpack.c.b16 %v494, %v486
    %v615 = vpack.c.b16 %v503, %v495
    %v616 = vpack.c.b16 %v504, %v496
    %v617 = vpack.c.b16 %v505, %v497
    %v618 = vpack.c.b16 %v506, %v498
    %v619 = vpack.c.b16 %v507, %v499
    %v620 = vpack.c.b16 %v508, %v500
    %v621 = vpack.c.b16 %v509, %v501
    %v622 = vpack.c.b16 %v510, %v502
    %v623 = vpack.c.b16 %v519, %v511
    %v624 = vpack.c.b16 %v520, %v512
    %v625 = vpack.c.b16 %v521, %v513
    %v626 = vpack.c.b16 %v522, %v514
    %v627 = vpack.c.b16 %v523, %v515
    %v628 = vpack.c.b16 %v524, %v516
    %v629 = vpack.c.b16 %v525, %v517
    %v630 = vpack.c.b16 %v526, %v518
    %v631 = vpack.c.b16 %v535, %v527
    %v632 = vpack.c.b16 %v536, %v528
    %v633 = vpack.c.b16 %v537, %v529
    %v634 = vpack.c.b16 %v538, %v530
    %v635 = vpack.c.b16 %v539, %v531
    %v636 = vpack.c.b16 %v540, %v532
    %v637 = vpack.c.b16 %v541, %v533
    %v638 = vpack.c.b16 %v542, %v534
    %v639 = vpack.c.b16 %v551, %v543
    %v640 = vpack.c.b16 %v552, %v544
    %v641 = vpack.c.b16 %v553, %v545
    %v642 = vpack.c.b16 %v554, %v546
    %v643 = vpack.c.b16 %v555, %v547
    %v644 = vpack.c.b16 %v556, %v548
    %v645 = vpack.c.b16 %v557, %v549
    %v646 = vpack.c.b16 %v558, %v550
    %v647 = vpack.c.b16 %v567, %v559
    %v648 = vpack.c.b16 %v568, %v560
    %v649 = vpack.c.b16 %v569, %v561
    %v650 = vpack.c.b16 %v570, %v562
    %v651 = vpack.c.b16 %v571, %v563
    %v652 = vpack.c.b16 %v572, %v564
    %v653 = vpack.c.b16 %v573, %v565
    %v654 = vpack.c.b16 %v574, %v566
    %v655 = vpack.c.b16 %v583, %v575
    %v656 = vpack.c.b16 %v584, %v576
    %v657 = vpack.c.b16 %v585, %v577
    %v658 = vpack.c.b16 %v586, %v578
    %v659 = vpack.c.b16 %v587, %v579
    %v660 = vpack.c.b16 %v588, %v580
    %v661 = vpack.c.b16 %v589, %v581
    %v662 = vpack.c.b16 %v590, %v582
    %v663 = vpack.c.b16 %v599, %v591
    %v664 = vpack.c.b16 %v600, %v592
    %v665 = vpack.c.b16 %v601, %v593
    %v666 = vpack.c.b16 %v602, %v594
    %v667 = vpack.c.b16 %v603, %v595
    %v668 = vpack.c.b16 %v604, %v596
    %v669 = vpack.c.b16 %v605, %v597
    %v670 = vpack.c.b16 %v606, %v598
    %735 = vmatprep.subr.bf16.mxu0 %v608
    %736 = vmatpush1.bf16.msra.mxu0 %v607
    %737 = vmatprep.subr.bf16.mxu0 %v616
    %738 = vmatpush1.bf16.msra.mxu0 %v615
    %739 = vmatprep.subr.bf16.mxu0 %v624
    %740 = vmatpush1.bf16.msra.mxu0 %v623
    %741 = vmatprep.subr.bf16.mxu0 %v632
    %742 = vmatpush1.bf16.msra.mxu0 %v631
    %743 = vmatprep.subr.bf16.mxu0 %v640
    %744 = vmatpush1.bf16.msra.mxu0 %v639
    %745 = vmatprep.subr.bf16.mxu0 %v648
    %746 = vmatpush1.bf16.msra.mxu0 %v647
    %747 = vmatprep.subr.bf16.mxu0 %v656
    %748 = vmatpush1.bf16.msra.mxu0 %v655
    %749 = vmatprep.subr.bf16.mxu0 %v664
    %750 = vmatpush1.bf16.msra.mxu0 %v663
    %751 = vmatprep.subr.bf16.mxu0 0
    %752 = vmatpush1.bf16.msra.mxu0 0
    %753 = vmatprep.subr.bf16.mxu0 0
    %754 = vmatpush1.bf16.msra.mxu0 0
    %755 = vmatprep.subr.bf16.mxu0 0
    %756 = vmatpush1.bf16.msra.mxu0 0
    %757 = vmatprep.subr.bf16.mxu0 0
    %758 = vmatpush1.bf16.msra.mxu0 0
    %759 = vmatprep.subr.bf16.mxu0 0
    %760 = vmatpush1.bf16.msra.mxu0 0
    %761 = vmatprep.subr.bf16.mxu0 0
    %762 = vmatpush1.bf16.msra.mxu0 0
    %763 = vmatprep.subr.bf16.mxu0 0
    %764 = vmatpush1.bf16.msra.mxu0 0
    %765 = vmatprep.subr.bf16.mxu0 0
    %766 = vmatpush1.bf16.msra.mxu0 0
    %767 = vmatprep.mubr.bf16.mxu0 0
    %768 = vmatmul.mubr.bf16.gmra.mrb[0].mxu0 %v308
    %v769 = vpop.f32.mrb[0].mxu0
    %v770 = vadd.f32 %v378, %v769
    %v771 = vpop.f32.mrb[0].mxu0
    %v772 = vadd.f32 %v382, %v771
    %v773 = vpop.f32.mrb[0].mxu0
    %v774 = vadd.f32 %v378, %v773
    %v775 = vpop.f32.mrb[0].mxu0
    %v776 = vadd.f32 %v382, %v775
    %777 = vdwg.mxu0
    %778 = vmatprep.subr.bf16.mxu0 %v610
    %779 = vmatpush1.bf16.msra.mxu0 %v609
    %780 = vmatprep.subr.bf16.mxu0 %v618
    %781 = vmatpush1.bf16.msra.mxu0 %v617
    %782 = vmatprep.subr.bf16.mxu0 %v626
    %783 = vmatpush1.bf16.msra.mxu0 %v625
    %784 = vmatprep.subr.bf16.mxu0 %v634
    %785 = vmatpush1.bf16.msra.mxu0 %v633
    %786 = vmatprep.subr.bf16.mxu0 %v642
    %787 = vmatpush1.bf16.msra.mxu0 %v641
    %788 = vmatprep.subr.bf16.mxu0 %v650
    %789 = vmatpush1.bf16.msra.mxu0 %v649
    %790 = vmatprep.subr.bf16.mxu0 %v658
    %791 = vmatpush1.bf16.msra.mxu0 %v657
    %792 = vmatprep.subr.bf16.mxu0 %v666
    %793 = vmatpush1.bf16.msra.mxu0 %v665
    %794 = vmatprep.subr.bf16.mxu0 0
    %795 = vmatpush1.bf16.msra.mxu0 0
    %796 = vmatprep.subr.bf16.mxu0 0
    %797 = vmatpush1.bf16.msra.mxu0 0
    %798 = vmatprep.subr.bf16.mxu0 0
    %799 = vmatpush1.bf16.msra.mxu0 0
    %800 = vmatprep.subr.bf16.mxu0 0
    %801 = vmatpush1.bf16.msra.mxu0 0
    %802 = vmatprep.subr.bf16.mxu0 0
    %803 = vmatpush1.bf16.msra.mxu0 0
    %804 = vmatprep.subr.bf16.mxu0 0
    %805 = vmatpush1.bf16.msra.mxu0 0
    %806 = vmatprep.subr.bf16.mxu0 0
    %807 = vmatpush1.bf16.msra.mxu0 0
    %808 = vmatprep.subr.bf16.mxu0 0
    %809 = vmatpush1.bf16.msra.mxu0 0
    %810 = vmatprep.mubr.bf16.mxu0 0
    %811 = vmatmul.mubr.bf16.gmra.mrb[0].mxu0 %v308
    %v812 = vpop.f32.mrb[0].mxu0
    %v813 = vadd.f32 %v386, %v812
    %v814 = vpop.f32.mrb[0].mxu0
    %v815 = vadd.f32 %v390, %v814
    %v816 = vpop.f32.mrb[0].mxu0
    %v817 = vadd.f32 %v386, %v816
    %v818 = vpop.f32.mrb[0].mxu0
    %v819 = vadd.f32 %v390, %v818
    %820 = vdwg.mxu0
    %821 = vmatprep.subr.bf16.mxu0 %v612
    %822 = vmatpush1.bf16.msra.mxu0 %v611
    %823 = vmatprep.subr.bf16.mxu0 %v620
    %824 = vmatpush1.bf16.msra.mxu0 %v619
    %825 = vmatprep.subr.bf16.mxu0 %v628
    %826 = vmatpush1.bf16.msra.mxu0 %v627
    %827 = vmatprep.subr.bf16.mxu0 %v636
    %828 = vmatpush1.bf16.msra.mxu0 %v635
    %829 = vmatprep.subr.bf16.mxu0 %v644
    %830 = vmatpush1.bf16.msra.mxu0 %v643
    %831 = vmatprep.subr.bf16.mxu0 %v652
    %832 = vmatpush1.bf16.msra.mxu0 %v651
    %833 = vmatprep.subr.bf16.mxu0 %v660
    %834 = vmatpush1.bf16.msra.mxu0 %v659
    %835 = vmatprep.subr.bf16.mxu0 %v668
    %836 = vmatpush1.bf16.msra.mxu0 %v667
    %837 = vmatprep.subr.bf16.mxu0 0
    %838 = vmatpush1.bf16.msra.mxu0 0
    %839 = vmatprep.subr.bf16.mxu0 0
    %840 = vmatpush1.bf16.msra.mxu0 0
    %841 = vmatprep.subr.bf16.mxu0 0
    %842 = vmatpush1.bf16.msra.mxu0 0
    %843 = vmatprep.subr.bf16.mxu0 0
    %844 = vmatpush1.bf16.msra.mxu0 0
    %845 = vmatprep.subr.bf16.mxu0 0
    %846 = vmatpush1.bf16.msra.mxu0 0
    %847 = vmatprep.subr.bf16.mxu0 0
    %848 = vmatpush1.bf16.msra.mxu0 0
    %849 = vmatprep.subr.bf16.mxu0 0
    %850 = vmatpush1.bf16.msra.mxu0 0
    %851 = vmatprep.subr.bf16.mxu0 0
    %852 = vmatpush1.bf16.msra.mxu0 0
    %853 = vmatprep.mubr.bf16.mxu0 0
    %854 = vmatmul.mubr.bf16.gmra.mrb[0].mxu0 %v308
    %v855 = vpop.f32.mrb[0].mxu0
    %v856 = vadd.f32 %v394, %v855
    %v857 = vpop.f32.mrb[0].mxu0
    %v858 = vadd.f32 %v398, %v857
    %v859 = vpop.f32.mrb[0].mxu0
    %v860 = vadd.f32 %v394, %v859
    %v861 = vpop.f32.mrb[0].mxu0
    %v862 = vadd.f32 %v398, %v861
    %863 = vdwg.mxu0
    %864 = vmatprep.subr.bf16.mxu0 %v614
    %865 = vmatpush1.bf16.msra.mxu0 %v613
    %866 = vmatprep.subr.bf16.mxu0 %v622
    %867 = vmatpush1.bf16.msra.mxu0 %v621
    %868 = vmatprep.subr.bf16.mxu0 %v630
    %869 = vmatpush1.bf16.msra.mxu0 %v629
    %870 = vmatprep.subr.bf16.mxu0 %v638
    %871 = vmatpush1.bf16.msra.mxu0 %v637
    %872 = vmatprep.subr.bf16.mxu0 %v646
    %873 = vmatpush1.bf16.msra.mxu0 %v645
    %874 = vmatprep.subr.bf16.mxu0 %v654
    %875 = vmatpush1.bf16.msra.mxu0 %v653
    %876 = vmatprep.subr.bf16.mxu0 %v662
    %877 = vmatpush1.bf16.msra.mxu0 %v661
    %878 = vmatprep.subr.bf16.mxu0 %v670
    %879 = vmatpush1.bf16.msra.mxu0 %v669
    %880 = vmatprep.subr.bf16.mxu0 0
    %881 = vmatpush1.bf16.msra.mxu0 0
    %882 = vmatprep.subr.bf16.mxu0 0
    %883 = vmatpush1.bf16.msra.mxu0 0
    %884 = vmatprep.subr.bf16.mxu0 0
    %885 = vmatpush1.bf16.msra.mxu0 0
    %886 = vmatprep.subr.bf16.mxu0 0
    %887 = vmatpush1.bf16.msra.mxu0 0
    %888 = vmatprep.subr.bf16.mxu0 0
    %889 = vmatpush1.bf16.msra.mxu0 0
    %890 = vmatprep.subr.bf16.mxu0 0
    %891 = vmatpush1.bf16.msra.mxu0 0
    %892 = vmatprep.subr.bf16.mxu0 0
    %893 = vmatpush1.bf16.msra.mxu0 0
    %894 = vmatprep.subr.bf16.mxu0 0
    %895 = vmatpush1.bf16.msra.mxu0 0
    %896 = vmatprep.mubr.bf16.mxu0 0
    %897 = vmatmul.mubr.bf16.gmra.mrb[0].mxu0 %v308
    %v898 = vpop.f32.mrb[0].mxu0
    %v899 = vadd.f32 %v402, %v898
    %v900 = vpop.f32.mrb[0].mxu0
    %v901 = vadd.f32 %v406, %v900
    %v902 = vpop.f32.mrb[0].mxu0
    %v903 = vadd.f32 %v402, %v902
    %v904 = vpop.f32.mrb[0].mxu0
    %v905 = vadd.f32 %v406, %v904
    %906 = vdwg.mxu0
    %v907 = vmax.f32 %v770, 0.0
    %v908 = vmax.f32 %v772, 0.0
    %v909 = vmax.f32 %v813, 0.0
    %v910 = vmax.f32 %v815, 0.0
    %v911 = vmax.f32 %v856, 0.0
    %v912 = vmax.f32 %v858, 0.0
    %v913 = vmax.f32 %v899, 0.0
    %v914 = vmax.f32 %v901, 0.0
    %v915 = vmax.f32 %v774, 0.0
    %v916 = vmax.f32 %v776, 0.0
    %v917 = vmax.f32 %v817, 0.0
    %v918 = vmax.f32 %v819, 0.0
    %v919 = vmax.f32 %v860, 0.0
    %v920 = vmax.f32 %v862, 0.0
    %v921 = vmax.f32 %v903, 0.0
    %v922 = vmax.f32 %v905, 0.0
    %v923 = vpack.c.bf16 %v915, %v907
    %v924 = vpack.c.bf16 %v916, %v908
    %v925 = vpack.c.bf16 %v917, %v909
    %v926 = vpack.c.bf16 %v918, %v910
    %v927 = vpack.c.bf16 %v919, %v911
    %v928 = vpack.c.bf16 %v920, %v912
    %v929 = vpack.c.bf16 %v921, %v913
    %v930 = vpack.c.bf16 %v922, %v914
    %v931 = vld [vmem:[#allocation13] sm:$0xff]
    %v932 = vld [vmem:[#allocation13 + $0x8] sm:$0xff]
    %v933 = vld [vmem:[#allocation13 + $0x10] sm:$0xff]
    %v934 = vld [vmem:[#allocation13 + $0x18] sm:$0xff]
    %v935 = vld [vmem:[#allocation13 + $0x20] sm:$0xff]
    %v936 = vld [vmem:[#allocation13 + $0x28] sm:$0xff]
    %v937 = vld [vmem:[#allocation13 + $0x30] sm:$0xff]
    %v938 = vld [vmem:[#allocation13 + $0x38] sm:$0xff]
    %v939 = vld [vmem:[#allocation13 + $0x40] sm:$0xff]
    %v940 = vld [vmem:[#allocation13 + $0x48] sm:$0xff]
    %v941 = vld [vmem:[#allocation13 + $0x50] sm:$0xff]
    %v942 = vld [vmem:[#allocation13 + $0x58] sm:$0xff]
    %v943 = vld [vmem:[#allocation13 + $0x60] sm:$0xff]
    %v944 = vld [vmem:[#allocation13 + $0x68] sm:$0xff]
    %v945 = vld [vmem:[#allocation13 + $0x70] sm:$0xff]
    %v946 = vld [vmem:[#allocation13 + $0x78] sm:$0xff]
    %v947 = vld [vmem:[#allocation13 + $0x80] sm:$0xff]
    %v948 = vld [vmem:[#allocation13 + $0x88] sm:$0xff]
    %v949 = vld [vmem:[#allocation13 + $0x90] sm:$0xff]
    %v950 = vld [vmem:[#allocation13 + $0x98] sm:$0xff]
    %v951 = vld [vmem:[#allocation13 + $0xa0] sm:$0xff]
    %v952 = vld [vmem:[#allocation13 + $0xa8] sm:$0xff]
    %v953 = vld [vmem:[#allocation13 + $0xb0] sm:$0xff]
    %v954 = vld [vmem:[#allocation13 + $0xb8] sm:$0xff]
    %v955 = vld [vmem:[#allocation13 + $0xc0] sm:$0xff]
    %v956 = vld [vmem:[#allocation13 + $0xc8] sm:$0xff]
    %v957 = vld [vmem:[#allocation13 + $0xd0] sm:$0xff]
    %v958 = vld [vmem:[#allocation13 + $0xd8] sm:$0xff]
    %v959 = vld [vmem:[#allocation13 + $0xe0] sm:$0xff]
    %v960 = vld [vmem:[#allocation13 + $0xe8] sm:$0xff]
    %v961 = vld [vmem:[#allocation13 + $0xf0] sm:$0xff]
    %v962 = vld [vmem:[#allocation13 + $0xf8] sm:$0xff]
    %v963 = vld [vmem:[#allocation13 + $0x100] sm:$0xff]
    %v964 = vld [vmem:[#allocation13 + $0x108] sm:$0xff]
    %v965 = vld [vmem:[#allocation13 + $0x110] sm:$0xff]
    %v966 = vld [vmem:[#allocation13 + $0x118] sm:$0xff]
    %v967 = vld [vmem:[#allocation13 + $0x120] sm:$0xff]
    %v968 = vld [vmem:[#allocation13 + $0x128] sm:$0xff]
    %v969 = vld [vmem:[#allocation13 + $0x130] sm:$0xff]
    %v970 = vld [vmem:[#allocation13 + $0x138] sm:$0xff]
    %v971 = vld [vmem:[#allocation13 + $0x140] sm:$0xff]
    %v972 = vld [vmem:[#allocation13 + $0x148] sm:$0xff]
    %v973 = vld [vmem:[#allocation13 + $0x150] sm:$0xff]
    %v974 = vld [vmem:[#allocation13 + $0x158] sm:$0xff]
    %v975 = vld [vmem:[#allocation13 + $0x160] sm:$0xff]
    %v976 = vld [vmem:[#allocation13 + $0x168] sm:$0xff]
    %v977 = vld [vmem:[#allocation13 + $0x170] sm:$0xff]
    %v978 = vld [vmem:[#allocation13 + $0x178] sm:$0xff]
    %v979 = vld [vmem:[#allocation13 + $0x180] sm:$0xff]
    %v980 = vld [vmem:[#allocation13 + $0x188] sm:$0xff]
    %v981 = vld [vmem:[#allocation13 + $0x190] sm:$0xff]
    %v982 = vld [vmem:[#allocation13 + $0x198] sm:$0xff]
    %v983 = vld [vmem:[#allocation13 + $0x1a0] sm:$0xff]
    %v984 = vld [vmem:[#allocation13 + $0x1a8] sm:$0xff]
    %v985 = vld [vmem:[#allocation13 + $0x1b0] sm:$0xff]
    %v986 = vld [vmem:[#allocation13 + $0x1b8] sm:$0xff]
    %v987 = vld [vmem:[#allocation13 + $0x1c0] sm:$0xff]
    %v988 = vld [vmem:[#allocation13 + $0x1c8] sm:$0xff]
    %v989 = vld [vmem:[#allocation13 + $0x1d0] sm:$0xff]
    %v990 = vld [vmem:[#allocation13 + $0x1d8] sm:$0xff]
    %v991 = vld [vmem:[#allocation13 + $0x1e0] sm:$0xff]
    %v992 = vld [vmem:[#allocation13 + $0x1e8] sm:$0xff]
    %v993 = vld [vmem:[#allocation13 + $0x1f0] sm:$0xff]
    %v994 = vld [vmem:[#allocation13 + $0x1f8] sm:$0xff]
    %v995 = vld [vmem:[#allocation13 + $0x200] sm:$0xff]
    %v996 = vld [vmem:[#allocation13 + $0x208] sm:$0xff]
    %v997 = vld [vmem:[#allocation13 + $0x210] sm:$0xff]
    %v998 = vld [vmem:[#allocation13 + $0x218] sm:$0xff]
    %v999 = vld [vmem:[#allocation13 + $0x220] sm:$0xff]
    %v1000 = vld [vmem:[#allocation13 + $0x228] sm:$0xff]
    %v1001 = vld [vmem:[#allocation13 + $0x230] sm:$0xff]
    %v1002 = vld [vmem:[#allocation13 + $0x238] sm:$0xff]
    %v1003 = vld [vmem:[#allocation13 + $0x240] sm:$0xff]
    %v1004 = vld [vmem:[#allocation13 + $0x248] sm:$0xff]
    %v1005 = vld [vmem:[#allocation13 + $0x250] sm:$0xff]
    %v1006 = vld [vmem:[#allocation13 + $0x258] sm:$0xff]
    %v1007 = vld [vmem:[#allocation13 + $0x260] sm:$0xff]
    %v1008 = vld [vmem:[#allocation13 + $0x268] sm:$0xff]
    %v1009 = vld [vmem:[#allocation13 + $0x270] sm:$0xff]
    %v1010 = vld [vmem:[#allocation13 + $0x278] sm:$0xff]
    %v1011 = vld [vmem:[#allocation13 + $0x280] sm:$0xff]
    %v1012 = vld [vmem:[#allocation13 + $0x288] sm:$0xff]
    %v1013 = vld [vmem:[#allocation13 + $0x290] sm:$0xff]
    %v1014 = vld [vmem:[#allocation13 + $0x298] sm:$0xff]
    %v1015 = vld [vmem:[#allocation13 + $0x2a0] sm:$0xff]
    %v1016 = vld [vmem:[#allocation13 + $0x2a8] sm:$0xff]
    %v1017 = vld [vmem:[#allocation13 + $0x2b0] sm:$0xff]
    %v1018 = vld [vmem:[#allocation13 + $0x2b8] sm:$0xff]
    %v1019 = vld [vmem:[#allocation13 + $0x2c0] sm:$0xff]
    %v1020 = vld [vmem:[#allocation13 + $0x2c8] sm:$0xff]
    %v1021 = vld [vmem:[#allocation13 + $0x2d0] sm:$0xff]
    %v1022 = vld [vmem:[#allocation13 + $0x2d8] sm:$0xff]
    %v1023 = vld [vmem:[#allocation13 + $0x2e0] sm:$0xff]
    %v1024 = vld [vmem:[#allocation13 + $0x2e8] sm:$0xff]
    %v1025 = vld [vmem:[#allocation13 + $0x2f0] sm:$0xff]
    %v1026 = vld [vmem:[#allocation13 + $0x2f8] sm:$0xff]
    %v1027 = vld [vmem:[#allocation13 + $0x300] sm:$0xff]
    %v1028 = vld [vmem:[#allocation13 + $0x308] sm:$0xff]
    %v1029 = vld [vmem:[#allocation13 + $0x310] sm:$0xff]
    %v1030 = vld [vmem:[#allocation13 + $0x318] sm:$0xff]
    %v1031 = vld [vmem:[#allocation13 + $0x320] sm:$0xff]
    %v1032 = vld [vmem:[#allocation13 + $0x328] sm:$0xff]
    %v1033 = vld [vmem:[#allocation13 + $0x330] sm:$0xff]
    %v1034 = vld [vmem:[#allocation13 + $0x338] sm:$0xff]
    %v1035 = vld [vmem:[#allocation13 + $0x340] sm:$0xff]
    %v1036 = vld [vmem:[#allocation13 + $0x348] sm:$0xff]
    %v1037 = vld [vmem:[#allocation13 + $0x350] sm:$0xff]
    %v1038 = vld [vmem:[#allocation13 + $0x358] sm:$0xff]
    %v1039 = vld [vmem:[#allocation13 + $0x360] sm:$0xff]
    %v1040 = vld [vmem:[#allocation13 + $0x368] sm:$0xff]
    %v1041 = vld [vmem:[#allocation13 + $0x370] sm:$0xff]
    %v1042 = vld [vmem:[#allocation13 + $0x378] sm:$0xff]
    %v1043 = vld [vmem:[#allocation13 + $0x380] sm:$0xff]
    %v1044 = vld [vmem:[#allocation13 + $0x388] sm:$0xff]
    %v1045 = vld [vmem:[#allocation13 + $0x390] sm:$0xff]
    %v1046 = vld [vmem:[#allocation13 + $0x398] sm:$0xff]
    %v1047 = vld [vmem:[#allocation13 + $0x3a0] sm:$0xff]
    %v1048 = vld [vmem:[#allocation13 + $0x3a8] sm:$0xff]
    %v1049 = vld [vmem:[#allocation13 + $0x3b0] sm:$0xff]
    %v1050 = vld [vmem:[#allocation13 + $0x3b8] sm:$0xff]
    %v1051 = vld [vmem:[#allocation13 + $0x3c0] sm:$0xff]
    %v1052 = vld [vmem:[#allocation13 + $0x3c8] sm:$0xff]
    %v1053 = vld [vmem:[#allocation13 + $0x3d0] sm:$0xff]
    %v1054 = vld [vmem:[#allocation13 + $0x3d8] sm:$0xff]
    %v1055 = vld [vmem:[#allocation13 + $0x3e0] sm:$0xff]
    %v1056 = vld [vmem:[#allocation13 + $0x3e8] sm:$0xff]
    %v1057 = vld [vmem:[#allocation13 + $0x3f0] sm:$0xff]
    %v1058 = vld [vmem:[#allocation13 + $0x3f8] sm:$0xff]
    %v1059 = vld [vmem:[#allocation14] sm:$0x3]
    %v1061 = vlaneseq
    %v1062 = vshrl.u32 %v1061, 7
    %v1063 = vsub.s32 0, %v1062
    %v1064 = vrot.slane %v1059, %v1063
    %v1065 = vlaneseq
    %v1066 = vshrl.u32 %v1065, 7
    %v1067 = vsub.s32 1, %v1066
    %v1068 = vrot.slane %v1059, %v1067
    %v1199 = vunpack.c.l.b16 %v931
    %v1200 = vunpack.c.h.b16 %v931
    %v1201 = vunpack.c.l.b16 %v932
    %v1202 = vunpack.c.h.b16 %v932
    %v1203 = vunpack.c.l.b16 %v933
    %v1204 = vunpack.c.h.b16 %v933
    %v1205 = vunpack.c.l.b16 %v934
    %v1206 = vunpack.c.h.b16 %v934
    %v1207 = vunpack.c.l.b16 %v935
    %v1208 = vunpack.c.h.b16 %v935
    %v1209 = vunpack.c.l.b16 %v936
    %v1210 = vunpack.c.h.b16 %v936
    %v1211 = vunpack.c.l.b16 %v937
    %v1212 = vunpack.c.h.b16 %v937
    %v1213 = vunpack.c.l.b16 %v938
    %v1214 = vunpack.c.h.b16 %v938
    %v1215 = vunpack.c.l.b16 %v939
    %v1216 = vunpack.c.h.b16 %v939
    %v1217 = vunpack.c.l.b16 %v940
    %v1218 = vunpack.c.h.b16 %v940
    %v1219 = vunpack.c.l.b16 %v941
    %v1220 = vunpack.c.h.b16 %v941
    %v1221 = vunpack.c.l.b16 %v942
    %v1222 = vunpack.c.h.b16 %v942
    %v1223 = vunpack.c.l.b16 %v943
    %v1224 = vunpack.c.h.b16 %v943
    %v1225 = vunpack.c.l.b16 %v944
    %v1226 = vunpack.c.h.b16 %v944
    %v1227 = vunpack.c.l.b16 %v945
    %v1228 = vunpack.c.h.b16 %v945
    %v1229 = vunpack.c.l.b16 %v946
    %v1230 = vunpack.c.h.b16 %v946
    %v1231 = vunpack.c.l.b16 %v947
    %v1232 = vunpack.c.h.b16 %v947
    %v1233 = vunpack.c.l.b16 %v948
    %v1234 = vunpack.c.h.b16 %v948
    %v1235 = vunpack.c.l.b16 %v949
    %v1236 = vunpack.c.h.b16 %v949
    %v1237 = vunpack.c.l.b16 %v950
    %v1238 = vunpack.c.h.b16 %v950
    %v1239 = vunpack.c.l.b16 %v951
    %v1240 = vunpack.c.h.b16 %v951
    %v1241 = vunpack.c.l.b16 %v952
    %v1242 = vunpack.c.h.b16 %v952
    %v1243 = vunpack.c.l.b16 %v953
    %v1244 = vunpack.c.h.b16 %v953
    %v1245 = vunpack.c.l.b16 %v954
    %v1246 = vunpack.c.h.b16 %v954
    %v1247 = vunpack.c.l.b16 %v955
    %v1248 = vunpack.c.h.b16 %v955
    %v1249 = vunpack.c.l.b16 %v956
    %v1250 = vunpack.c.h.b16 %v956
    %v1251 = vunpack.c.l.b16 %v957
    %v1252 = vunpack.c.h.b16 %v957
    %v1253 = vunpack.c.l.b16 %v958
    %v1254 = vunpack.c.h.b16 %v958
    %v1255 = vunpack.c.l.b16 %v959
    %v1256 = vunpack.c.h.b16 %v959
    %v1257 = vunpack.c.l.b16 %v960
    %v1258 = vunpack.c.h.b16 %v960
    %v1259 = vunpack.c.l.b16 %v961
    %v1260 = vunpack.c.h.b16 %v961
    %v1261 = vunpack.c.l.b16 %v962
    %v1262 = vunpack.c.h.b16 %v962
    %v1263 = vunpack.c.l.b16 %v963
    %v1264 = vunpack.c.h.b16 %v963
    %v1265 = vunpack.c.l.b16 %v964
    %v1266 = vunpack.c.h.b16 %v964
    %v1267 = vunpack.c.l.b16 %v965
    %v1268 = vunpack.c.h.b16 %v965
    %v1269 = vunpack.c.l.b16 %v966
    %v1270 = vunpack.c.h.b16 %v966
    %v1271 = vunpack.c.l.b16 %v967
    %v1272 = vunpack.c.h.b16 %v967
    %v1273 = vunpack.c.l.b16 %v968
    %v1274 = vunpack.c.h.b16 %v968
    %v1275 = vunpack.c.l.b16 %v969
    %v1276 = vunpack.c.h.b16 %v969
    %v1277 = vunpack.c.l.b16 %v970
    %v1278 = vunpack.c.h.b16 %v970
    %v1279 = vunpack.c.l.b16 %v971
    %v1280 = vunpack.c.h.b16 %v971
    %v1281 = vunpack.c.l.b16 %v972
    %v1282 = vunpack.c.h.b16 %v972
    %v1283 = vunpack.c.l.b16 %v973
    %v1284 = vunpack.c.h.b16 %v973
    %v1285 = vunpack.c.l.b16 %v974
    %v1286 = vunpack.c.h.b16 %v974
    %v1287 = vunpack.c.l.b16 %v975
    %v1288 = vunpack.c.h.b16 %v975
    %v1289 = vunpack.c.l.b16 %v976
    %v1290 = vunpack.c.h.b16 %v976
    %v1291 = vunpack.c.l.b16 %v977
    %v1292 = vunpack.c.h.b16 %v977
    %v1293 = vunpack.c.l.b16 %v978
    %v1294 = vunpack.c.h.b16 %v978
    %v1295 = vunpack.c.l.b16 %v979
    %v1296 = vunpack.c.h.b16 %v979
    %v1297 = vunpack.c.l.b16 %v980
    %v1298 = vunpack.c.h.b16 %v980
    %v1299 = vunpack.c.l.b16 %v981
    %v1300 = vunpack.c.h.b16 %v981
    %v1301 = vunpack.c.l.b16 %v982
    %v1302 = vunpack.c.h.b16 %v982
    %v1303 = vunpack.c.l.b16 %v983
    %v1304 = vunpack.c.h.b16 %v983
    %v1305 = vunpack.c.l.b16 %v984
    %v1306 = vunpack.c.h.b16 %v984
    %v1307 = vunpack.c.l.b16 %v985
    %v1308 = vunpack.c.h.b16 %v985
    %v1309 = vunpack.c.l.b16 %v986
    %v1310 = vunpack.c.h.b16 %v986
    %v1311 = vunpack.c.l.b16 %v987
    %v1312 = vunpack.c.h.b16 %v987
    %v1313 = vunpack.c.l.b16 %v988
    %v1314 = vunpack.c.h.b16 %v988
    %v1315 = vunpack.c.l.b16 %v989
    %v1316 = vunpack.c.h.b16 %v989
    %v1317 = vunpack.c.l.b16 %v990
    %v1318 = vunpack.c.h.b16 %v990
    %v1319 = vunpack.c.l.b16 %v991
    %v1320 = vunpack.c.h.b16 %v991
    %v1321 = vunpack.c.l.b16 %v992
    %v1322 = vunpack.c.h.b16 %v992
    %v1323 = vunpack.c.l.b16 %v993
    %v1324 = vunpack.c.h.b16 %v993
    %v1325 = vunpack.c.l.b16 %v994
    %v1326 = vunpack.c.h.b16 %v994
    %v1327 = vunpack.c.l.b16 %v995
    %v1328 = vunpack.c.h.b16 %v995
    %v1329 = vunpack.c.l.b16 %v996
    %v1330 = vunpack.c.h.b16 %v996
    %v1331 = vunpack.c.l.b16 %v997
    %v1332 = vunpack.c.h.b16 %v997
    %v1333 = vunpack.c.l.b16 %v998
    %v1334 = vunpack.c.h.b16 %v998
    %v1335 = vunpack.c.l.b16 %v999
    %v1336 = vunpack.c.h.b16 %v999
    %v1337 = vunpack.c.l.b16 %v1000
    %v1338 = vunpack.c.h.b16 %v1000
    %v1339 = vunpack.c.l.b16 %v1001
    %v1340 = vunpack.c.h.b16 %v1001
    %v1341 = vunpack.c.l.b16 %v1002
    %v1342 = vunpack.c.h.b16 %v1002
    %v1343 = vunpack.c.l.b16 %v1003
    %v1344 = vunpack.c.h.b16 %v1003
    %v1345 = vunpack.c.l.b16 %v1004
    %v1346 = vunpack.c.h.b16 %v1004
    %v1347 = vunpack.c.l.b16 %v1005
    %v1348 = vunpack.c.h.b16 %v1005
    %v1349 = vunpack.c.l.b16 %v1006
    %v1350 = vunpack.c.h.b16 %v1006
    %v1351 = vunpack.c.l.b16 %v1007
    %v1352 = vunpack.c.h.b16 %v1007
    %v1353 = vunpack.c.l.b16 %v1008
    %v1354 = vunpack.c.h.b16 %v1008
    %v1355 = vunpack.c.l.b16 %v1009
    %v1356 = vunpack.c.h.b16 %v1009
    %v1357 = vunpack.c.l.b16 %v1010
    %v1358 = vunpack.c.h.b16 %v1010
    %v1359 = vunpack.c.l.b16 %v1011
    %v1360 = vunpack.c.h.b16 %v1011
    %v1361 = vunpack.c.l.b16 %v1012
    %v1362 = vunpack.c.h.b16 %v1012
    %v1363 = vunpack.c.l.b16 %v1013
    %v1364 = vunpack.c.h.b16 %v1013
    %v1365 = vunpack.c.l.b16 %v1014
    %v1366 = vunpack.c.h.b16 %v1014
    %v1367 = vunpack.c.l.b16 %v1015
    %v1368 = vunpack.c.h.b16 %v1015
    %v1369 = vunpack.c.l.b16 %v1016
    %v1370 = vunpack.c.h.b16 %v1016
    %v1371 = vunpack.c.l.b16 %v1017
    %v1372 = vunpack.c.h.b16 %v1017
    %v1373 = vunpack.c.l.b16 %v1018
    %v1374 = vunpack.c.h.b16 %v1018
    %v1375 = vunpack.c.l.b16 %v1019
    %v1376 = vunpack.c.h.b16 %v1019
    %v1377 = vunpack.c.l.b16 %v1020
    %v1378 = vunpack.c.h.b16 %v1020
    %v1379 = vunpack.c.l.b16 %v1021
    %v1380 = vunpack.c.h.b16 %v1021
    %v1381 = vunpack.c.l.b16 %v1022
    %v1382 = vunpack.c.h.b16 %v1022
    %v1383 = vunpack.c.l.b16 %v1023
    %v1384 = vunpack.c.h.b16 %v1023
    %v1385 = vunpack.c.l.b16 %v1024
    %v1386 = vunpack.c.h.b16 %v1024
    %v1387 = vunpack.c.l.b16 %v1025
    %v1388 = vunpack.c.h.b16 %v1025
    %v1389 = vunpack.c.l.b16 %v1026
    %v1390 = vunpack.c.h.b16 %v1026
    %v1391 = vunpack.c.l.b16 %v1027
    %v1392 = vunpack.c.h.b16 %v1027
    %v1393 = vunpack.c.l.b16 %v1028
    %v1394 = vunpack.c.h.b16 %v1028
    %v1395 = vunpack.c.l.b16 %v1029
    %v1396 = vunpack.c.h.b16 %v1029
    %v1397 = vunpack.c.l.b16 %v1030
    %v1398 = vunpack.c.h.b16 %v1030
    %v1399 = vunpack.c.l.b16 %v1031
    %v1400 = vunpack.c.h.b16 %v1031
    %v1401 = vunpack.c.l.b16 %v1032
    %v1402 = vunpack.c.h.b16 %v1032
    %v1403 = vunpack.c.l.b16 %v1033
    %v1404 = vunpack.c.h.b16 %v1033
    %v1405 = vunpack.c.l.b16 %v1034
    %v1406 = vunpack.c.h.b16 %v1034
    %v1407 = vunpack.c.l.b16 %v1035
    %v1408 = vunpack.c.h.b16 %v1035
    %v1409 = vunpack.c.l.b16 %v1036
    %v1410 = vunpack.c.h.b16 %v1036
    %v1411 = vunpack.c.l.b16 %v1037
    %v1412 = vunpack.c.h.b16 %v1037
    %v1413 = vunpack.c.l.b16 %v1038
    %v1414 = vunpack.c.h.b16 %v1038
    %v1415 = vunpack.c.l.b16 %v1039
    %v1416 = vunpack.c.h.b16 %v1039
    %v1417 = vunpack.c.l.b16 %v1040
    %v1418 = vunpack.c.h.b16 %v1040
    %v1419 = vunpack.c.l.b16 %v1041
    %v1420 = vunpack.c.h.b16 %v1041
    %v1421 = vunpack.c.l.b16 %v1042
    %v1422 = vunpack.c.h.b16 %v1042
    %v1423 = vunpack.c.l.b16 %v1043
    %v1424 = vunpack.c.h.b16 %v1043
    %v1425 = vunpack.c.l.b16 %v1044
    %v1426 = vunpack.c.h.b16 %v1044
    %v1427 = vunpack.c.l.b16 %v1045
    %v1428 = vunpack.c.h.b16 %v1045
    %v1429 = vunpack.c.l.b16 %v1046
    %v1430 = vunpack.c.h.b16 %v1046
    %v1431 = vunpack.c.l.b16 %v1047
    %v1432 = vunpack.c.h.b16 %v1047
    %v1433 = vunpack.c.l.b16 %v1048
    %v1434 = vunpack.c.h.b16 %v1048
    %v1435 = vunpack.c.l.b16 %v1049
    %v1436 = vunpack.c.h.b16 %v1049
    %v1437 = vunpack.c.l.b16 %v1050
    %v1438 = vunpack.c.h.b16 %v1050
    %v1439 = vunpack.c.l.b16 %v1051
    %v1440 = vunpack.c.h.b16 %v1051
    %v1441 = vunpack.c.l.b16 %v1052
    %v1442 = vunpack.c.h.b16 %v1052
    %v1443 = vunpack.c.l.b16 %v1053
    %v1444 = vunpack.c.h.b16 %v1053
    %v1445 = vunpack.c.l.b16 %v1054
    %v1446 = vunpack.c.h.b16 %v1054
    %v1447 = vunpack.c.l.b16 %v1055
    %v1448 = vunpack.c.h.b16 %v1055
    %v1449 = vunpack.c.l.b16 %v1056
    %v1450 = vunpack.c.h.b16 %v1056
    %v1451 = vunpack.c.l.b16 %v1057
    %v1452 = vunpack.c.h.b16 %v1057
    %v1453 = vunpack.c.l.b16 %v1058
    %v1454 = vunpack.c.h.b16 %v1058
    %v1455 = vpack.c.b16 %v1201, %v1199
    %v1456 = vpack.c.b16 %v1202, %v1200
    %v1457 = vpack.c.b16 %v1205, %v1203
    %v1458 = vpack.c.b16 %v1206, %v1204
    %v1459 = vpack.c.b16 %v1209, %v1207
    %v1460 = vpack.c.b16 %v1210, %v1208
    %v1461 = vpack.c.b16 %v1213, %v1211
    %v1462 = vpack.c.b16 %v1214, %v1212
    %v1463 = vpack.c.b16 %v1217, %v1215
    %v1464 = vpack.c.b16 %v1218, %v1216
    %v1465 = vpack.c.b16 %v1221, %v1219
    %v1466 = vpack.c.b16 %v1222, %v1220
    %v1467 = vpack.c.b16 %v1225, %v1223
    %v1468 = vpack.c.b16 %v1226, %v1224
    %v1469 = vpack.c.b16 %v1229, %v1227
    %v1470 = vpack.c.b16 %v1230, %v1228
    %v1471 = vpack.c.b16 %v1233, %v1231
    %v1472 = vpack.c.b16 %v1234, %v1232
    %v1473 = vpack.c.b16 %v1237, %v1235
    %v1474 = vpack.c.b16 %v1238, %v1236
    %v1475 = vpack.c.b16 %v1241, %v1239
    %v1476 = vpack.c.b16 %v1242, %v1240
    %v1477 = vpack.c.b16 %v1245, %v1243
    %v1478 = vpack.c.b16 %v1246, %v1244
    %v1479 = vpack.c.b16 %v1249, %v1247
    %v1480 = vpack.c.b16 %v1250, %v1248
    %v1481 = vpack.c.b16 %v1253, %v1251
    %v1482 = vpack.c.b16 %v1254, %v1252
    %v1483 = vpack.c.b16 %v1257, %v1255
    %v1484 = vpack.c.b16 %v1258, %v1256
    %v1485 = vpack.c.b16 %v1261, %v1259
    %v1486 = vpack.c.b16 %v1262, %v1260
    %v1487 = vpack.c.b16 %v1265, %v1263
    %v1488 = vpack.c.b16 %v1266, %v1264
    %v1489 = vpack.c.b16 %v1269, %v1267
    %v1490 = vpack.c.b16 %v1270, %v1268
    %v1491 = vpack.c.b16 %v1273, %v1271
    %v1492 = vpack.c.b16 %v1274, %v1272
    %v1493 = vpack.c.b16 %v1277, %v1275
    %v1494 = vpack.c.b16 %v1278, %v1276
    %v1495 = vpack.c.b16 %v1281, %v1279
    %v1496 = vpack.c.b16 %v1282, %v1280
    %v1497 = vpack.c.b16 %v1285, %v1283
    %v1498 = vpack.c.b16 %v1286, %v1284
    %v1499 = vpack.c.b16 %v1289, %v1287
    %v1500 = vpack.c.b16 %v1290, %v1288
    %v1501 = vpack.c.b16 %v1293, %v1291
    %v1502 = vpack.c.b16 %v1294, %v1292
    %v1503 = vpack.c.b16 %v1297, %v1295
    %v1504 = vpack.c.b16 %v1298, %v1296
    %v1505 = vpack.c.b16 %v1301, %v1299
    %v1506 = vpack.c.b16 %v1302, %v1300
    %v1507 = vpack.c.b16 %v1305, %v1303
    %v1508 = vpack.c.b16 %v1306, %v1304
    %v1509 = vpack.c.b16 %v1309, %v1307
    %v1510 = vpack.c.b16 %v1310, %v1308
    %v1511 = vpack.c.b16 %v1313, %v1311
    %v1512 = vpack.c.b16 %v1314, %v1312
    %v1513 = vpack.c.b16 %v1317, %v1315
    %v1514 = vpack.c.b16 %v1318, %v1316
    %v1515 = vpack.c.b16 %v1321, %v1319
    %v1516 = vpack.c.b16 %v1322, %v1320
    %v1517 = vpack.c.b16 %v1325, %v1323
    %v1518 = vpack.c.b16 %v1326, %v1324
    %v1519 = vpack.c.b16 %v1329, %v1327
    %v1520 = vpack.c.b16 %v1330, %v1328
    %v1521 = vpack.c.b16 %v1333, %v1331
    %v1522 = vpack.c.b16 %v1334, %v1332
    %v1523 = vpack.c.b16 %v1337, %v1335
    %v1524 = vpack.c.b16 %v1338, %v1336
    %v1525 = vpack.c.b16 %v1341, %v1339
    %v1526 = vpack.c.b16 %v1342, %v1340
    %v1527 = vpack.c.b16 %v1345, %v1343
    %v1528 = vpack.c.b16 %v1346, %v1344
    %v1529 = vpack.c.b16 %v1349, %v1347
    %v1530 = vpack.c.b16 %v1350, %v1348
    %v1531 = vpack.c.b16 %v1353, %v1351
    %v1532 = vpack.c.b16 %v1354, %v1352
    %v1533 = vpack.c.b16 %v1357, %v1355
    %v1534 = vpack.c.b16 %v1358, %v1356
    %v1535 = vpack.c.b16 %v1361, %v1359
    %v1536 = vpack.c.b16 %v1362, %v1360
    %v1537 = vpack.c.b16 %v1365, %v1363
    %v1538 = vpack.c.b16 %v1366, %v1364
    %v1539 = vpack.c.b16 %v1369, %v1367
    %v1540 = vpack.c.b16 %v1370, %v1368
    %v1541 = vpack.c.b16 %v1373, %v1371
    %v1542 = vpack.c.b16 %v1374, %v1372
    %v1543 = vpack.c.b16 %v1377, %v1375
    %v1544 = vpack.c.b16 %v1378, %v1376
    %v1545 = vpack.c.b16 %v1381, %v1379
    %v1546 = vpack.c.b16 %v1382, %v1380
    %v1547 = vpack.c.b16 %v1385, %v1383
    %v1548 = vpack.c.b16 %v1386, %v1384
    %v1549 = vpack.c.b16 %v1389, %v1387
    %v1550 = vpack.c.b16 %v1390, %v1388
    %v1551 = vpack.c.b16 %v1393, %v1391
    %v1552 = vpack.c.b16 %v1394, %v1392
    %v1553 = vpack.c.b16 %v1397, %v1395
    %v1554 = vpack.c.b16 %v1398, %v1396
    %v1555 = vpack.c.b16 %v1401, %v1399
    %v1556 = vpack.c.b16 %v1402, %v1400
    %v1557 = vpack.c.b16 %v1405, %v1403
    %v1558 = vpack.c.b16 %v1406, %v1404
    %v1559 = vpack.c.b16 %v1409, %v1407
    %v1560 = vpack.c.b16 %v1410, %v1408
    %v1561 = vpack.c.b16 %v1413, %v1411
    %v1562 = vpack.c.b16 %v1414, %v1412
    %v1563 = vpack.c.b16 %v1417, %v1415
    %v1564 = vpack.c.b16 %v1418, %v1416
    %v1565 = vpack.c.b16 %v1421, %v1419
    %v1566 = vpack.c.b16 %v1422, %v1420
    %v1567 = vpack.c.b16 %v1425, %v1423
    %v1568 = vpack.c.b16 %v1426, %v1424
    %v1569 = vpack.c.b16 %v1429, %v1427
    %v1570 = vpack.c.b16 %v1430, %v1428
    %v1571 = vpack.c.b16 %v1433, %v1431
    %v1572 = vpack.c.b16 %v1434, %v1432
    %v1573 = vpack.c.b16 %v1437, %v1435
    %v1574 = vpack.c.b16 %v1438, %v1436
    %v1575 = vpack.c.b16 %v1441, %v1439
    %v1576 = vpack.c.b16 %v1442, %v1440
    %v1577 = vpack.c.b16 %v1445, %v1443
    %v1578 = vpack.c.b16 %v1446, %v1444
    %v1579 = vpack.c.b16 %v1449, %v1447
    %v1580 = vpack.c.b16 %v1450, %v1448
    %v1581 = vpack.c.b16 %v1453, %v1451
    %v1582 = vpack.c.b16 %v1454, %v1452
    %1711 = vmatprep.subr.bf16.mxu0 %v1456
    %1712 = vmatpush1.bf16.msra.mxu0 %v1455
    %1713 = vmatprep.subr.bf16.mxu0 %v1458
    %1714 = vmatpush1.bf16.msra.mxu0 %v1457
    %1715 = vmatprep.subr.bf16.mxu0 %v1460
    %1716 = vmatpush1.bf16.msra.mxu0 %v1459
    %1717 = vmatprep.subr.bf16.mxu0 %v1462
    %1718 = vmatpush1.bf16.msra.mxu0 %v1461
    %1719 = vmatprep.subr.bf16.mxu0 %v1464
    %1720 = vmatpush1.bf16.msra.mxu0 %v1463
    %1721 = vmatprep.subr.bf16.mxu0 %v1466
    %1722 = vmatpush1.bf16.msra.mxu0 %v1465
    %1723 = vmatprep.subr.bf16.mxu0 %v1468
    %1724 = vmatpush1.bf16.msra.mxu0 %v1467
    %1725 = vmatprep.subr.bf16.mxu0 %v1470
    %1726 = vmatpush1.bf16.msra.mxu0 %v1469
    %1727 = vmatprep.subr.bf16.mxu0 %v1472
    %1728 = vmatpush1.bf16.msra.mxu0 %v1471
    %1729 = vmatprep.subr.bf16.mxu0 %v1474
    %1730 = vmatpush1.bf16.msra.mxu0 %v1473
    %1731 = vmatprep.subr.bf16.mxu0 %v1476
    %1732 = vmatpush1.bf16.msra.mxu0 %v1475
    %1733 = vmatprep.subr.bf16.mxu0 %v1478
    %1734 = vmatpush1.bf16.msra.mxu0 %v1477
    %1735 = vmatprep.subr.bf16.mxu0 %v1480
    %1736 = vmatpush1.bf16.msra.mxu0 %v1479
    %1737 = vmatprep.subr.bf16.mxu0 %v1482
    %1738 = vmatpush1.bf16.msra.mxu0 %v1481
    %1739 = vmatprep.subr.bf16.mxu0 %v1484
    %1740 = vmatpush1.bf16.msra.mxu0 %v1483
    %1741 = vmatprep.subr.bf16.mxu0 %v1486
    %1742 = vmatpush1.bf16.msra.mxu0 %v1485
    %1743 = vmatprep.mubr.bf16.mxu0 %v924
    %1744 = vmatmul.mubr.bf16.gmra.mrb[0].mxu0 %v923
    %v1745 = vpop.f32.mrb[0].mxu0
    %v1746 = vadd.f32 %v1064, %v1745
    %v1747 = vpop.f32.mrb[0].mxu0
    %v1748 = vadd.f32 %v1068, %v1747
    %v1749 = vpop.f32.mrb[0].mxu0
    %v1750 = vadd.f32 %v1064, %v1749
    %v1751 = vpop.f32.mrb[0].mxu0
    %v1752 = vadd.f32 %v1068, %v1751
    %1753 = vdwg.mxu0
    %1754 = vmatprep.subr.bf16.mxu0 %v1488
    %1755 = vmatpush1.bf16.msra.mxu0 %v1487
    %1756 = vmatprep.subr.bf16.mxu0 %v1490
    %1757 = vmatpush1.bf16.msra.mxu0 %v1489
    %1758 = vmatprep.subr.bf16.mxu0 %v1492
    %1759 = vmatpush1.bf16.msra.mxu0 %v1491
    %1760 = vmatprep.subr.bf16.mxu0 %v1494
    %1761 = vmatpush1.bf16.msra.mxu0 %v1493
    %1762 = vmatprep.subr.bf16.mxu0 %v1496
    %1763 = vmatpush1.bf16.msra.mxu0 %v1495
    %1764 = vmatprep.subr.bf16.mxu0 %v1498
    %1765 = vmatpush1.bf16.msra.mxu0 %v1497
    %1766 = vmatprep.subr.bf16.mxu0 %v1500
    %1767 = vmatpush1.bf16.msra.mxu0 %v1499
    %1768 = vmatprep.subr.bf16.mxu0 %v1502
    %1769 = vmatpush1.bf16.msra.mxu0 %v1501
    %1770 = vmatprep.subr.bf16.mxu0 %v1504
    %1771 = vmatpush1.bf16.msra.mxu0 %v1503
    %1772 = vmatprep.subr.bf16.mxu0 %v1506
    %1773 = vmatpush1.bf16.msra.mxu0 %v1505
    %1774 = vmatprep.subr.bf16.mxu0 %v1508
    %1775 = vmatpush1.bf16.msra.mxu0 %v1507
    %1776 = vmatprep.subr.bf16.mxu0 %v1510
    %1777 = vmatpush1.bf16.msra.mxu0 %v1509
    %1778 = vmatprep.subr.bf16.mxu0 %v1512
    %1779 = vmatpush1.bf16.msra.mxu0 %v1511
    %1780 = vmatprep.subr.bf16.mxu0 %v1514
    %1781 = vmatpush1.bf16.msra.mxu0 %v1513
    %1782 = vmatprep.subr.bf16.mxu0 %v1516
    %1783 = vmatpush1.bf16.msra.mxu0 %v1515
    %1784 = vmatprep.subr.bf16.mxu0 %v1518
    %1785 = vmatpush1.bf16.msra.mxu0 %v1517
    %1786 = vmatprep.mubr.bf16.mxu0 %v926
    %1787 = vmatmul.mubr.bf16.gmra.mrb[0].mxu0 %v925
    %v1788 = vpop.f32.mrb[0].mxu0
    %v1789 = vadd.f32 %v1746, %v1788
    %v1790 = vpop.f32.mrb[0].mxu0
    %v1791 = vadd.f32 %v1748, %v1790
    %v1792 = vpop.f32.mrb[0].mxu0
    %v1793 = vadd.f32 %v1750, %v1792
    %v1794 = vpop.f32.mrb[0].mxu0
    %v1795 = vadd.f32 %v1752, %v1794
    %1796 = vdwg.mxu0
    %1797 = vmatprep.subr.bf16.mxu0 %v1520
    %1798 = vmatpush1.bf16.msra.mxu0 %v1519
    %1799 = vmatprep.subr.bf16.mxu0 %v1522
    %1800 = vmatpush1.bf16.msra.mxu0 %v1521
    %1801 = vmatprep.subr.bf16.mxu0 %v1524
    %1802 = vmatpush1.bf16.msra.mxu0 %v1523
    %1803 = vmatprep.subr.bf16.mxu0 %v1526
    %1804 = vmatpush1.bf16.msra.mxu0 %v1525
    %1805 = vmatprep.subr.bf16.mxu0 %v1528
    %1806 = vmatpush1.bf16.msra.mxu0 %v1527
    %1807 = vmatprep.subr.bf16.mxu0 %v1530
    %1808 = vmatpush1.bf16.msra.mxu0 %v1529
    %1809 = vmatprep.subr.bf16.mxu0 %v1532
    %1810 = vmatpush1.bf16.msra.mxu0 %v1531
    %1811 = vmatprep.subr.bf16.mxu0 %v1534
    %1812 = vmatpush1.bf16.msra.mxu0 %v1533
    %1813 = vmatprep.subr.bf16.mxu0 %v1536
    %1814 = vmatpush1.bf16.msra.mxu0 %v1535
    %1815 = vmatprep.subr.bf16.mxu0 %v1538
    %1816 = vmatpush1.bf16.msra.mxu0 %v1537
    %1817 = vmatprep.subr.bf16.mxu0 %v1540
    %1818 = vmatpush1.bf16.msra.mxu0 %v1539
    %1819 = vmatprep.subr.bf16.mxu0 %v1542
    %1820 = vmatpush1.bf16.msra.mxu0 %v1541
    %1821 = vmatprep.subr.bf16.mxu0 %v1544
    %1822 = vmatpush1.bf16.msra.mxu0 %v1543
    %1823 = vmatprep.subr.bf16.mxu0 %v1546
    %1824 = vmatpush1.bf16.msra.mxu0 %v1545
    %1825 = vmatprep.subr.bf16.mxu0 %v1548
    %1826 = vmatpush1.bf16.msra.mxu0 %v1547
    %1827 = vmatprep.subr.bf16.mxu0 %v1550
    %1828 = vmatpush1.bf16.msra.mxu0 %v1549
    %1829 = vmatprep.mubr.bf16.mxu0 %v928
    %1830 = vmatmul.mubr.bf16.gmra.mrb[0].mxu0 %v927
    %v1831 = vpop.f32.mrb[0].mxu0
    %v1832 = vadd.f32 %v1789, %v1831
    %v1833 = vpop.f32.mrb[0].mxu0
    %v1834 = vadd.f32 %v1791, %v1833
    %v1835 = vpop.f32.mrb[0].mxu0
    %v1836 = vadd.f32 %v1793, %v1835
    %v1837 = vpop.f32.mrb[0].mxu0
    %v1838 = vadd.f32 %v1795, %v1837
    %1839 = vdwg.mxu0
    %1840 = vmatprep.subr.bf16.mxu0 %v1552
    %1841 = vmatpush1.bf16.msra.mxu0 %v1551
    %1842 = vmatprep.subr.bf16.mxu0 %v1554
    %1843 = vmatpush1.bf16.msra.mxu0 %v1553
    %1844 = vmatprep.subr.bf16.mxu0 %v1556
    %1845 = vmatpush1.bf16.msra.mxu0 %v1555
    %1846 = vmatprep.subr.bf16.mxu0 %v1558
    %1847 = vmatpush1.bf16.msra.mxu0 %v1557
    %1848 = vmatprep.subr.bf16.mxu0 %v1560
    %1849 = vmatpush1.bf16.msra.mxu0 %v1559
    %1850 = vmatprep.subr.bf16.mxu0 %v1562
    %1851 = vmatpush1.bf16.msra.mxu0 %v1561
    %1852 = vmatprep.subr.bf16.mxu0 %v1564
    %1853 = vmatpush1.bf16.msra.mxu0 %v1563
    %1854 = vmatprep.subr.bf16.mxu0 %v1566
    %1855 = vmatpush1.bf16.msra.mxu0 %v1565
    %1856 = vmatprep.subr.bf16.mxu0 %v1568
    %1857 = vmatpush1.bf16.msra.mxu0 %v1567
    %1858 = vmatprep.subr.bf16.mxu0 %v1570
    %1859 = vmatpush1.bf16.msra.mxu0 %v1569
    %1860 = vmatprep.subr.bf16.mxu0 %v1572
    %1861 = vmatpush1.bf16.msra.mxu0 %v1571
    %1862 = vmatprep.subr.bf16.mxu0 %v1574
    %1863 = vmatpush1.bf16.msra.mxu0 %v1573
    %1864 = vmatprep.subr.bf16.mxu0 %v1576
    %1865 = vmatpush1.bf16.msra.mxu0 %v1575
    %1866 = vmatprep.subr.bf16.mxu0 %v1578
    %1867 = vmatpush1.bf16.msra.mxu0 %v1577
    %1868 = vmatprep.subr.bf16.mxu0 %v1580
    %1869 = vmatpush1.bf16.msra.mxu0 %v1579
    %1870 = vmatprep.subr.bf16.mxu0 %v1582
    %1871 = vmatpush1.bf16.msra.mxu0 %v1581
    %1872 = vmatprep.mubr.bf16.mxu0 %v930
    %1873 = vmatmul.mubr.bf16.gmra.mrb[0].mxu0 %v929
    %v1874 = vpop.f32.mrb[0].mxu0
    %v1875 = vadd.f32 %v1832, %v1874
    %v1876 = vpop.f32.mrb[0].mxu0
    %v1877 = vadd.f32 %v1834, %v1876
    %v1878 = vpop.f32.mrb[0].mxu0
    %v1879 = vadd.f32 %v1836, %v1878
    %v1880 = vpop.f32.mrb[0].mxu0
    %v1881 = vadd.f32 %v1838, %v1880
    %1882 = vdwg.mxu0
    %v1883 = vmax.f32 %v1875, 0.0
    %v1884 = vmax.f32 %v1877, 0.0
    %v1885 = vmax.f32 %v1879, 0.0
    %v1886 = vmax.f32 %v1881, 0.0
    %v1887 = vpack.c.bf16 %v1885, %v1883
    %v1888 = vpack.c.bf16 %v1886, %v1884
    %v1889 = vld [vmem:[#allocation16] sm:$0xf]
    %v1890 = vld [vmem:[#allocation16 + $0x4] sm:$0xf]
    %v1891 = vld [vmem:[#allocation16 + $0x8] sm:$0xf]
    %v1892 = vld [vmem:[#allocation16 + $0xc] sm:$0xf]
    %v1893 = vld [vmem:[#allocation16 + $0x10] sm:$0xf]
    %v1894 = vld [vmem:[#allocation16 + $0x14] sm:$0xf]
    %v1895 = vld [vmem:[#allocation16 + $0x18] sm:$0xf]
    %v1896 = vld [vmem:[#allocation16 + $0x1c] sm:$0xf]
    %v1897 = vld [vmem:[#allocation16 + $0x20] sm:$0xf]
    %v1898 = vld [vmem:[#allocation16 + $0x24] sm:$0xf]
    %v1899 = vld [vmem:[#allocation16 + $0x28] sm:$0xf]
    %v1900 = vld [vmem:[#allocation16 + $0x2c] sm:$0xf]
    %v1901 = vld [vmem:[#allocation16 + $0x30] sm:$0xf]
    %v1902 = vld [vmem:[#allocation16 + $0x34] sm:$0xf]
    %v1903 = vld [vmem:[#allocation16 + $0x38] sm:$0xf]
    %v1904 = vld [vmem:[#allocation16 + $0x3c] sm:$0xf]
    %v1905 = vld [vmem:[#allocation16 + $0x40] sm:$0xf]
    %v1906 = vld [vmem:[#allocation16 + $0x44] sm:$0xf]
    %v1907 = vld [vmem:[#allocation16 + $0x48] sm:$0xf]
    %v1908 = vld [vmem:[#allocation16 + $0x4c] sm:$0xf]
    %v1909 = vld [vmem:[#allocation16 + $0x50] sm:$0xf]
    %v1910 = vld [vmem:[#allocation16 + $0x54] sm:$0xf]
    %v1911 = vld [vmem:[#allocation16 + $0x58] sm:$0xf]
    %v1912 = vld [vmem:[#allocation16 + $0x5c] sm:$0xf]
    %v1913 = vld [vmem:[#allocation16 + $0x60] sm:$0xf]
    %v1914 = vld [vmem:[#allocation16 + $0x64] sm:$0xf]
    %v1915 = vld [vmem:[#allocation16 + $0x68] sm:$0xf]
    %v1916 = vld [vmem:[#allocation16 + $0x6c] sm:$0xf]
    %v1917 = vld [vmem:[#allocation16 + $0x70] sm:$0xf]
    %v1918 = vld [vmem:[#allocation16 + $0x74] sm:$0xf]
    %v1919 = vld [vmem:[#allocation16 + $0x78] sm:$0xf]
    %v1920 = vld [vmem:[#allocation16 + $0x7c] sm:$0xf]
    %v1921 = vld [vmem:[#allocation17] sm:$0x1]
    %v1923 = vlaneseq
    %v1924 = vshrl.u32 %v1923, 7
    %v1925 = vsub.s32 0, %v1924
    %v1926 = vrot.slane %v1921, %v1925
    %v1960 = vunpack.c.l.b16 %v1889
    %v1961 = vunpack.c.l.b16 %v1890
    %v1962 = vunpack.c.l.b16 %v1891
    %v1963 = vunpack.c.l.b16 %v1892
    %v1964 = vunpack.c.l.b16 %v1893
    %v1965 = vunpack.c.l.b16 %v1894
    %v1966 = vunpack.c.l.b16 %v1895
    %v1967 = vunpack.c.l.b16 %v1896
    %v1968 = vunpack.c.l.b16 %v1897
    %v1969 = vunpack.c.l.b16 %v1898
    %v1970 = vunpack.c.l.b16 %v1899
    %v1971 = vunpack.c.l.b16 %v1900
    %v1972 = vunpack.c.l.b16 %v1901
    %v1973 = vunpack.c.l.b16 %v1902
    %v1974 = vunpack.c.l.b16 %v1903
    %v1975 = vunpack.c.l.b16 %v1904
    %v1976 = vunpack.c.l.b16 %v1905
    %v1977 = vunpack.c.l.b16 %v1906
    %v1978 = vunpack.c.l.b16 %v1907
    %v1979 = vunpack.c.l.b16 %v1908
    %v1980 = vunpack.c.l.b16 %v1909
    %v1981 = vunpack.c.l.b16 %v1910
    %v1982 = vunpack.c.l.b16 %v1911
    %v1983 = vunpack.c.l.b16 %v1912
    %v1984 = vunpack.c.l.b16 %v1913
    %v1985 = vunpack.c.l.b16 %v1914
    %v1986 = vunpack.c.l.b16 %v1915
    %v1987 = vunpack.c.l.b16 %v1916
    %v1988 = vunpack.c.l.b16 %v1917
    %v1989 = vunpack.c.l.b16 %v1918
    %v1990 = vunpack.c.l.b16 %v1919
    %v1991 = vunpack.c.l.b16 %v1920
    %v1992 = vpack.c.b16 %v1961, %v1960
    %v1993 = vpack.c.b16 %v1963, %v1962
    %v1994 = vpack.c.b16 %v1965, %v1964
    %v1995 = vpack.c.b16 %v1967, %v1966
    %v1996 = vpack.c.b16 %v1969, %v1968
    %v1997 = vpack.c.b16 %v1971, %v1970
    %v1998 = vpack.c.b16 %v1973, %v1972
    %v1999 = vpack.c.b16 %v1975, %v1974
    %v2000 = vpack.c.b16 %v1977, %v1976
    %v2001 = vpack.c.b16 %v1979, %v1978
    %v2002 = vpack.c.b16 %v1981, %v1980
    %v2003 = vpack.c.b16 %v1983, %v1982
    %v2004 = vpack.c.b16 %v1985, %v1984
    %v2005 = vpack.c.b16 %v1987, %v1986
    %v2006 = vpack.c.b16 %v1989, %v1988
    %v2007 = vpack.c.b16 %v1991, %v1990
    %2024 = vmatprep.subr.bf16.mxu0 0
    %2025 = vmatpush1.bf16.msra.mxu0 %v1992
    %2026 = vmatprep.subr.bf16.mxu0 0
    %2027 = vmatpush1.bf16.msra.mxu0 %v1993
    %2028 = vmatprep.subr.bf16.mxu0 0
    %2029 = vmatpush1.bf16.msra.mxu0 %v1994
    %2030 = vmatprep.subr.bf16.mxu0 0
    %2031 = vmatpush1.bf16.msra.mxu0 %v1995
    %2032 = vmatprep.subr.bf16.mxu0 0
    %2033 = vmatpush1.bf16.msra.mxu0 %v1996
    %2034 = vmatprep.subr.bf16.mxu0 0
    %2035 = vmatpush1.bf16.msra.mxu0 %v1997
    %2036 = vmatprep.subr.bf16.mxu0 0
    %2037 = vmatpush1.bf16.msra.mxu0 %v1998
    %2038 = vmatprep.subr.bf16.mxu0 0
    %2039 = vmatpush1.bf16.msra.mxu0 %v1999
    %2040 = vmatprep.subr.bf16.mxu0 0
    %2041 = vmatpush1.bf16.msra.mxu0 %v2000
    %2042 = vmatprep.subr.bf16.mxu0 0
    %2043 = vmatpush1.bf16.msra.mxu0 %v2001
    %2044 = vmatprep.subr.bf16.mxu0 0
    %2045 = vmatpush1.bf16.msra.mxu0 %v2002
    %2046 = vmatprep.subr.bf16.mxu0 0
    %2047 = vmatpush1.bf16.msra.mxu0 %v2003
    %2048 = vmatprep.subr.bf16.mxu0 0
    %2049 = vmatpush1.bf16.msra.mxu0 %v2004
    %2050 = vmatprep.subr.bf16.mxu0 0
    %2051 = vmatpush1.bf16.msra.mxu0 %v2005
    %2052 = vmatprep.subr.bf16.mxu0 0
    %2053 = vmatpush1.bf16.msra.mxu0 %v2006
    %2054 = vmatprep.subr.bf16.mxu0 0
    %2055 = vmatpush1.bf16.msra.mxu0 %v2007
    %2056 = vmatprep.mubr.bf16.mxu0 %v1888
    %2057 = vmatmul.mubr.bf16.gmra.mrb[0].mxu0 %v1887
    %v2058 = vpop.f32.mrb[0].mxu0
    %v2059 = vadd.f32 %v1926, %v2058
    %v2060 = vpop.f32.mrb[0].mxu0
    %v2061 = vpop.f32.mrb[0].mxu0
    %v2062 = vadd.f32 %v1926, %v2061
    %v2063 = vpop.f32.mrb[0].mxu0
    %2064 = vdwg.mxu0
    %2065 = vst [vmem:[#allocation19] sm:$0xff] %v2059
    %2066 = vst [vmem:[#allocation19 + $0x8] sm:$0xff] %v2062
    // Predicated region
    $region82: #{tpu_custom_call.1} parent=1 // pred_check
      _
    $region83: #{tpu_custom_call.1} parent=1 // pred_check_branch
      %2068 = sbr.rel (0) target = $region85
    $region84: #{tpu_custom_call.1} parent=1 // pred_region
      %s2070 = ssub.s32 256, 256
      %2071 = vsyncadd [#allocation4], %s2070
      %s2072 = sshll.u32 [#allocation19], 4
      %s2073 = int_to_ptr.vmem [resolvable:$true] %s2072
      %2078 = dma.vmem_to_hbm [thread:$0]  %s2073, 256, %s10, [#allocation4], 128, 128, 8
    $region85: #{tpu_custom_call.1} parent=1 // pred_fallthru
      _
    // Predicated region
    $region86: #{tpu_custom_call.1} parent=1 // pred_check
      _
    $region87: #{tpu_custom_call.1} parent=1 // pred_check_branch
      %2080 = sbr.rel (0) target = $region89
    $region88: #{tpu_custom_call.1} parent=1 // pred_region
      %2081 = dma.done [#allocation4], 256
    $region89: #{tpu_custom_call.1} parent=1 // pred_fallthru
      _
    %2082 = vsyncpa [#allocation3], 1
    %2083 = vsyncpa [#allocation6], 1
    %2084 = vsyncpa [#allocation9], 1
    %2085 = vsyncpa [#allocation12], 1
    %2086 = vsyncpa [#allocation15], 1
    %2087 = vsyncpa [#allocation18], 1
    %2088 = vsyncpa [#allocation4], 1

</llo_original>
